<compile_context>
chip_gen: v5e
topology: v5e:2x2
jax: 0.10.0
libtpu: 0.0.40
codegen_flags: <defaults>
</compile_context>

<pallas_src>
import jax
import jax.numpy as jnp
import numpy as np
from jax import lax
from jax.experimental import pallas as pl
from jax.experimental.pallas import tpu as pltpu


def _round_up(x, m):
    return ((x + m - 1) // m) * m


def _cdiv(a, b):
    return (a + b - 1) // b


def _make_kernel(mid, signs, chunk, compute_dtype):
    """Build the kernel with sign(w2) baked in as static constants."""
    use_bf16 = compute_dtype == jnp.bfloat16

    def kernel(a_ref, b_ref, wfc_ref, w1_ref, b1_ref, b2_ref, bfc_ref, out_ref):
        n_chunks = a_ref.shape[0] // chunk            # static
        wfc = wfc_ref[...]                            # (1, F) f32, hoisted
        b2 = b2_ref[0]
        bfc = bfc_ref[0]

        def chunk_body(c, carry):
            r0 = pl.multiple_of(c * chunk, chunk)
            A = a_ref[pl.ds(r0, chunk), :]            # (chunk, F) f32
            Bv = b_ref[pl.ds(r0, chunk), :]

            # Pairwise feature interactions (the 4 "stacked" rows fed to conv1).
            x1 = A * Bv
            x2 = A + Bv
            x3 = jnp.abs(A - Bv)
            x4 = x3 * x3
            if use_bf16:
                x1 = x1.astype(jnp.bfloat16)
                x2 = x2.astype(jnp.bfloat16)
                x3 = x3.astype(jnp.bfloat16)
                x4 = x4.astype(jnp.bfloat16)

            # conv1 (kernel (4,1)) + ReLU fused with conv2 (kernel (mid,1)).
            # |w2[m]| is already folded into w1/b1, so the accumulate is a
            # pure +/- relu(t) -- no per-m multiply.  All (chunk, F) values
            # live in vregs; weights are SMEM scalar splats.
            z = jnp.zeros((chunk, A.shape[1]), jnp.float32)
            for m in range(mid):                      # static unroll over mid
                s = signs[m]
                if s == 0.0:
                    continue
                w_a = w1_ref[m]
                w_b = w1_ref[mid + m]
                w_c = w1_ref[2 * mid + m]
                w_d = w1_ref[3 * mid + m]
                bm = b1_ref[m]
                if use_bf16:
                    w_a = w_a.astype(jnp.bfloat16)
                    w_b = w_b.astype(jnp.bfloat16)
                    w_c = w_c.astype(jnp.bfloat16)
                    w_d = w_d.astype(jnp.bfloat16)
                    bm = bm.astype(jnp.bfloat16)
                t = w_a * x1 + w_b * x2 + w_c * x3 + w_d * x4 + bm
                r = jnp.maximum(t, 0.0).astype(jnp.float32)
                if s > 0.0:
                    z = z + r
                else:
                    z = z - r

            # conv2 bias + ReLU (f32 epilogue).
            z = jnp.maximum(z + b2, 0.0)              # (chunk, F)

            # fc (F -> 1) + sigmoid, fused per chunk; tiny (chunk, 1) store.
            logit = jnp.sum(z * wfc, axis=-1, keepdims=True) + bfc
            out_ref[pl.ds(r0, chunk), :] = jax.nn.sigmoid(logit)
            return carry

        lax.fori_loop(0, n_chunks, chunk_body, 0, unroll=False)

    return kernel


def head_conv_forward(featsA, featsB, kparams, signs, *, block_b=128, chunk=8,
                      compute_dtype=jnp.float32):
    """Run the headCONV forward pass.

    kparams/signs come from prepare_params(); compute_dtype=jnp.bfloat16 is an
    opt-in packed-MAC path for v6e/v7x (validate against tolerance first).
    """
    B, F = featsA.shape
    mid = kparams["b1f"].shape[0]
    assert kparams["w1f"].shape == (4 * mid,)
    assert kparams["wfc"].shape == (1, F)
    assert len(signs) == mid

    # Batch tile: multiple of the vreg chunk, capped so the "parallel" batch
    # grid has >= 2 programs (v7x has 2 TensorCores per chip).
    bt = min(_round_up(block_b, chunk),
             max(chunk, _round_up(_cdiv(B, 2), chunk)))
    grid = (_cdiv(B, bt),)                            # no host-side padding

    kernel = _make_kernel(mid, tuple(signs), chunk, compute_dtype)
    smem_spec = pl.BlockSpec(memory_space=pltpu.MemorySpace.SMEM)

    out = pl.pallas_call(
        kernel,
        out_shape=jax.ShapeDtypeStruct((B, 1), jnp.float32),
        grid=grid,
        in_specs=[
            pl.BlockSpec((bt, F), lambda i: (i, 0)),   # featsA tile (VMEM)
            pl.BlockSpec((bt, F), lambda i: (i, 0)),   # featsB tile (VMEM)
            pl.BlockSpec((1, F), lambda i: (0, 0)),    # wfc row    (VMEM)
            smem_spec,                                 # w1f (4*mid,) SMEM
            smem_spec,                                 # b1f (mid,)   SMEM
            smem_spec,                                 # b2  (1,)     SMEM
            smem_spec,                                 # bfc (1,)     SMEM
        ],
        out_specs=pl.BlockSpec((bt, 1), lambda i: (i, 0)),
        compiler_params=pltpu.CompilerParams(
            dimension_semantics=("parallel",)),
    )(featsA, featsB, kparams["wfc"], kparams["w1f"], kparams["b1f"],
      kparams["b2"], kparams["bfc"])

    return out


def prepare_params(raw):
    """Host-side folding: w1f[h*mid+m] = w1[h,m]*|w2[m]|, b1f[m] = b1[m]*|w2[m]|.

    Returns (kernel_params, signs) where signs is a static Python tuple of
    sign(w2[m]) baked into the kernel (so the m-loop needs no w2 multiply).
    """
    w2 = np.asarray(raw["w2"], dtype=np.float32)
    signs = tuple(float(s) for s in np.sign(w2))
    absw2 = jnp.asarray(np.abs(w2), jnp.float32)
    w1f = (raw["w1"] * absw2[None, :]).reshape(-1).astype(jnp.float32)
    b1f = (raw["b1"] * absw2).astype(jnp.float32)
    kparams = {
        "w1f": w1f,
        "b1f": b1f,
        "b2": raw["b2"].astype(jnp.float32),
        "wfc": raw["wfc"].astype(jnp.float32),
        "bfc": raw["bfc"].astype(jnp.float32),
    }
    return kparams, signs


def head_conv_reference(featsA, featsB, raw):
    """Pure-JAX reference mirroring the PyTorch forward (uses raw params)."""
    x1 = featsA * featsB
    x2 = featsA + featsB
    x3 = jnp.abs(featsA - featsB)
    x4 = x3 * x3
    X = jnp.stack([x1, x2, x3, x4], axis=1)                  # (B, 4, F)
    y = jnp.einsum("bhf,hm->bmf", X, raw["w1"]) + raw["b1"][None, :, None]
    y = jnp.maximum(y, 0.0)
    z = jnp.einsum("bmf,m->bf", y, raw["w2"]) + raw["b2"][0]
    z = jnp.maximum(z, 0.0)
    logit = z @ raw["wfc"][0] + raw["bfc"][0]                # (B,)
    return jax.nn.sigmoid(logit)[:, None]                    # (B, 1)


def init_raw_params(key, in_features, mid):
    ks = jax.random.split(key, 6)
    return {
        "w1": 0.1 * jax.random.normal(ks[0], (4, mid), jnp.float32),   # [h, m]
        "b1": 0.1 * jax.random.normal(ks[1], (mid,), jnp.float32),
        "w2": 0.1 * jax.random.normal(ks[2], (mid,), jnp.float32),
        "b2": 0.1 * jax.random.normal(ks[3], (1,), jnp.float32),
        "wfc": 0.05 * jax.random.normal(ks[4], (1, in_features), jnp.float32),
        "bfc": 0.1 * jax.random.normal(ks[5], (1,), jnp.float32),
    }


if __name__ == "__main__":
    B, F, MID = 16, 256, 32      # small demo shapes; module defaults F=512, mid=32

    key = jax.random.PRNGKey(0)
    k_a, k_b, k_p = jax.random.split(key, 3)
    featsA = jax.random.normal(k_a, (B, F), jnp.float32)
    featsB = jax.random.normal(k_b, (B, F), jnp.float32)
    raw = init_raw_params(k_p, F, MID)
    kparams, signs = prepare_params(raw)

    # TODO(synk): opt-in compute_dtype=jnp.bfloat16 MAC path (v6e/v7x) needs
    # per-model validation against the 1e-4 tolerance; default stays f32.
    out = head_conv_forward(featsA, featsB, kparams, signs)
    out = jax.block_until_ready(out)

    ref = head_conv_reference(featsA, featsB, raw)
    assert out.shape == (B, 1)
    assert jnp.allclose(out, ref, rtol=1e-4, atol=1e-4), (out, ref)

    print("KERNEL_OK")
</pallas_src>

<mosaic_0001>
module attributes {stable_mosaic.version = 11 : i64} {
  func.func @kernel(%arg0: i32, %arg1: memref<8x256xf32, #tpu.memory_space<vmem>>, %arg2: memref<8x256xf32, #tpu.memory_space<vmem>>, %arg3: memref<1x256xf32, #tpu.memory_space<vmem>>, %arg4: memref<128xf32, #tpu.memory_space<smem>>, %arg5: memref<32xf32, #tpu.memory_space<smem>>, %arg6: memref<1xf32, #tpu.memory_space<smem>>, %arg7: memref<1xf32, #tpu.memory_space<smem>>, %arg8: memref<8x1xf32, #tpu.memory_space<vmem>>) attributes {dimension_semantics = [#tpu.dimension_semantics<parallel>], iteration_bounds = array<i64: 2>, scalar_prefetch = 0 : i64, scratch_operands = 0 : i64, tpu.core_type = #tpu.core_type<tc>, window_params = [{transform_indices = @transform_0, window_bounds = array<i64: 8, 256>}, {transform_indices = @transform_1, window_bounds = array<i64: 8, 256>}, {pipeline_mode = #tpu.pipeline_mode<synchronous>, transform_indices = @transform_2, window_bounds = array<i64: 1, 256>}, {transform_indices = @transform_3, window_bounds = array<i64: 128>}, {transform_indices = @transform_4, window_bounds = array<i64: 32>}, {transform_indices = @transform_5, window_bounds = array<i64: 1>}, {transform_indices = @transform_6, window_bounds = array<i64: 1>}, {transform_indices = @transform_7, window_bounds = array<i64: 8, 1>}]} {
    %c0 = arith.constant 0 : index
    %c0_0 = arith.constant 0 : index
    %0 = vector.load %arg3[%c0, %c0_0] : memref<1x256xf32, #tpu.memory_space<vmem>>, vector<1x256xf32>
    %c0_1 = arith.constant 0 : index
    %1 = memref.load %arg6[%c0_1] : memref<1xf32, #tpu.memory_space<smem>>
    %c0_2 = arith.constant 0 : index
    %2 = memref.load %arg7[%c0_2] : memref<1xf32, #tpu.memory_space<smem>>
    %c0_i32 = arith.constant 0 : i32
    %c8_i32 = arith.constant 8 : i32
    %3 = arith.muli %c0_i32, %c8_i32 : i32
    %4 = tpu.assume_multiple %3, 8 : i32
    %5 = arith.index_cast %4 : i32 to index
    %c0_3 = arith.constant 0 : index
    %6 = vector.load %arg1[%5, %c0_3] : memref<8x256xf32, #tpu.memory_space<vmem>>, vector<8x256xf32>
    %7 = arith.index_cast %4 : i32 to index
    %c0_4 = arith.constant 0 : index
    %8 = vector.load %arg2[%7, %c0_4] : memref<8x256xf32, #tpu.memory_space<vmem>>, vector<8x256xf32>
    %9 = arith.mulf %6, %8 : vector<8x256xf32>
    %10 = arith.addf %6, %8 : vector<8x256xf32>
    %11 = arith.subf %6, %8 : vector<8x256xf32>
    %12 = math.absf %11 : vector<8x256xf32>
    %13 = arith.mulf %12, %12 : vector<8x256xf32>
    %cst = arith.constant 0.000000e+00 : f32
    %14 = vector.broadcast %cst : f32 to vector<8x256xf32>
    %c0_5 = arith.constant 0 : index
    %15 = memref.load %arg4[%c0_5] : memref<128xf32, #tpu.memory_space<smem>>
    %c32 = arith.constant 32 : index
    %16 = memref.load %arg4[%c32] : memref<128xf32, #tpu.memory_space<smem>>
    %c64 = arith.constant 64 : index
    %17 = memref.load %arg4[%c64] : memref<128xf32, #tpu.memory_space<smem>>
    %c96 = arith.constant 96 : index
    %18 = memref.load %arg4[%c96] : memref<128xf32, #tpu.memory_space<smem>>
    %c0_6 = arith.constant 0 : index
    %19 = memref.load %arg5[%c0_6] : memref<32xf32, #tpu.memory_space<smem>>
    %20 = vector.broadcast %15 : f32 to vector<8x256xf32>
    %21 = arith.mulf %20, %9 : vector<8x256xf32>
    %22 = vector.broadcast %16 : f32 to vector<8x256xf32>
    %23 = arith.mulf %22, %10 : vector<8x256xf32>
    %24 = arith.addf %21, %23 : vector<8x256xf32>
    %25 = vector.broadcast %17 : f32 to vector<8x256xf32>
    %26 = arith.mulf %25, %12 : vector<8x256xf32>
    %27 = arith.addf %24, %26 : vector<8x256xf32>
    %28 = vector.broadcast %18 : f32 to vector<8x256xf32>
    %29 = arith.mulf %28, %13 : vector<8x256xf32>
    %30 = arith.addf %27, %29 : vector<8x256xf32>
    %31 = vector.broadcast %19 : f32 to vector<8x256xf32>
    %32 = arith.addf %30, %31 : vector<8x256xf32>
    %cst_7 = arith.constant 0.000000e+00 : f32
    %33 = vector.broadcast %cst_7 : f32 to vector<8x256xf32>
    %34 = arith.maximumf %32, %33 : vector<8x256xf32>
    %35 = arith.addf %14, %34 : vector<8x256xf32>
    %c1 = arith.constant 1 : index
    %36 = memref.load %arg4[%c1] : memref<128xf32, #tpu.memory_space<smem>>
    %c33 = arith.constant 33 : index
    %37 = memref.load %arg4[%c33] : memref<128xf32, #tpu.memory_space<smem>>
    %c65 = arith.constant 65 : index
    %38 = memref.load %arg4[%c65] : memref<128xf32, #tpu.memory_space<smem>>
    %c97 = arith.constant 97 : index
    %39 = memref.load %arg4[%c97] : memref<128xf32, #tpu.memory_space<smem>>
    %c1_8 = arith.constant 1 : index
    %40 = memref.load %arg5[%c1_8] : memref<32xf32, #tpu.memory_space<smem>>
    %41 = vector.broadcast %36 : f32 to vector<8x256xf32>
    %42 = arith.mulf %41, %9 : vector<8x256xf32>
    %43 = vector.broadcast %37 : f32 to vector<8x256xf32>
    %44 = arith.mulf %43, %10 : vector<8x256xf32>
    %45 = arith.addf %42, %44 : vector<8x256xf32>
    %46 = vector.broadcast %38 : f32 to vector<8x256xf32>
    %47 = arith.mulf %46, %12 : vector<8x256xf32>
    %48 = arith.addf %45, %47 : vector<8x256xf32>
    %49 = vector.broadcast %39 : f32 to vector<8x256xf32>
    %50 = arith.mulf %49, %13 : vector<8x256xf32>
    %51 = arith.addf %48, %50 : vector<8x256xf32>
    %52 = vector.broadcast %40 : f32 to vector<8x256xf32>
    %53 = arith.addf %51, %52 : vector<8x256xf32>
    %cst_9 = arith.constant 0.000000e+00 : f32
    %54 = vector.broadcast %cst_9 : f32 to vector<8x256xf32>
    %55 = arith.maximumf %53, %54 : vector<8x256xf32>
    %56 = arith.subf %35, %55 : vector<8x256xf32>
    %c2 = arith.constant 2 : index
    %57 = memref.load %arg4[%c2] : memref<128xf32, #tpu.memory_space<smem>>
    %c34 = arith.constant 34 : index
    %58 = memref.load %arg4[%c34] : memref<128xf32, #tpu.memory_space<smem>>
    %c66 = arith.constant 66 : index
    %59 = memref.load %arg4[%c66] : memref<128xf32, #tpu.memory_space<smem>>
    %c98 = arith.constant 98 : index
    %60 = memref.load %arg4[%c98] : memref<128xf32, #tpu.memory_space<smem>>
    %c2_10 = arith.constant 2 : index
    %61 = memref.load %arg5[%c2_10] : memref<32xf32, #tpu.memory_space<smem>>
    %62 = vector.broadcast %57 : f32 to vector<8x256xf32>
    %63 = arith.mulf %62, %9 : vector<8x256xf32>
    %64 = vector.broadcast %58 : f32 to vector<8x256xf32>
    %65 = arith.mulf %64, %10 : vector<8x256xf32>
    %66 = arith.addf %63, %65 : vector<8x256xf32>
    %67 = vector.broadcast %59 : f32 to vector<8x256xf32>
    %68 = arith.mulf %67, %12 : vector<8x256xf32>
    %69 = arith.addf %66, %68 : vector<8x256xf32>
    %70 = vector.broadcast %60 : f32 to vector<8x256xf32>
    %71 = arith.mulf %70, %13 : vector<8x256xf32>
    %72 = arith.addf %69, %71 : vector<8x256xf32>
    %73 = vector.broadcast %61 : f32 to vector<8x256xf32>
    %74 = arith.addf %72, %73 : vector<8x256xf32>
    %cst_11 = arith.constant 0.000000e+00 : f32
    %75 = vector.broadcast %cst_11 : f32 to vector<8x256xf32>
    %76 = arith.maximumf %74, %75 : vector<8x256xf32>
    %77 = arith.subf %56, %76 : vector<8x256xf32>
    %c3 = arith.constant 3 : index
    %78 = memref.load %arg4[%c3] : memref<128xf32, #tpu.memory_space<smem>>
    %c35 = arith.constant 35 : index
    %79 = memref.load %arg4[%c35] : memref<128xf32, #tpu.memory_space<smem>>
    %c67 = arith.constant 67 : index
    %80 = memref.load %arg4[%c67] : memref<128xf32, #tpu.memory_space<smem>>
    %c99 = arith.constant 99 : index
    %81 = memref.load %arg4[%c99] : memref<128xf32, #tpu.memory_space<smem>>
    %c3_12 = arith.constant 3 : index
    %82 = memref.load %arg5[%c3_12] : memref<32xf32, #tpu.memory_space<smem>>
    %83 = vector.broadcast %78 : f32 to vector<8x256xf32>
    %84 = arith.mulf %83, %9 : vector<8x256xf32>
    %85 = vector.broadcast %79 : f32 to vector<8x256xf32>
    %86 = arith.mulf %85, %10 : vector<8x256xf32>
    %87 = arith.addf %84, %86 : vector<8x256xf32>
    %88 = vector.broadcast %80 : f32 to vector<8x256xf32>
    %89 = arith.mulf %88, %12 : vector<8x256xf32>
    %90 = arith.addf %87, %89 : vector<8x256xf32>
    %91 = vector.broadcast %81 : f32 to vector<8x256xf32>
    %92 = arith.mulf %91, %13 : vector<8x256xf32>
    %93 = arith.addf %90, %92 : vector<8x256xf32>
    %94 = vector.broadcast %82 : f32 to vector<8x256xf32>
    %95 = arith.addf %93, %94 : vector<8x256xf32>
    %cst_13 = arith.constant 0.000000e+00 : f32
    %96 = vector.broadcast %cst_13 : f32 to vector<8x256xf32>
    %97 = arith.maximumf %95, %96 : vector<8x256xf32>
    %98 = arith.subf %77, %97 : vector<8x256xf32>
    %c4 = arith.constant 4 : index
    %99 = memref.load %arg4[%c4] : memref<128xf32, #tpu.memory_space<smem>>
    %c36 = arith.constant 36 : index
    %100 = memref.load %arg4[%c36] : memref<128xf32, #tpu.memory_space<smem>>
    %c68 = arith.constant 68 : index
    %101 = memref.load %arg4[%c68] : memref<128xf32, #tpu.memory_space<smem>>
    %c100 = arith.constant 100 : index
    %102 = memref.load %arg4[%c100] : memref<128xf32, #tpu.memory_space<smem>>
    %c4_14 = arith.constant 4 : index
    %103 = memref.load %arg5[%c4_14] : memref<32xf32, #tpu.memory_space<smem>>
    %104 = vector.broadcast %99 : f32 to vector<8x256xf32>
    %105 = arith.mulf %104, %9 : vector<8x256xf32>
    %106 = vector.broadcast %100 : f32 to vector<8x256xf32>
    %107 = arith.mulf %106, %10 : vector<8x256xf32>
    %108 = arith.addf %105, %107 : vector<8x256xf32>
    %109 = vector.broadcast %101 : f32 to vector<8x256xf32>
    %110 = arith.mulf %109, %12 : vector<8x256xf32>
    %111 = arith.addf %108, %110 : vector<8x256xf32>
    %112 = vector.broadcast %102 : f32 to vector<8x256xf32>
    %113 = arith.mulf %112, %13 : vector<8x256xf32>
    %114 = arith.addf %111, %113 : vector<8x256xf32>
    %115 = vector.broadcast %103 : f32 to vector<8x256xf32>
    %116 = arith.addf %114, %115 : vector<8x256xf32>
    %cst_15 = arith.constant 0.000000e+00 : f32
    %117 = vector.broadcast %cst_15 : f32 to vector<8x256xf32>
    %118 = arith.maximumf %116, %117 : vector<8x256xf32>
    %119 = arith.subf %98, %118 : vector<8x256xf32>
    %c5 = arith.constant 5 : index
    %120 = memref.load %arg4[%c5] : memref<128xf32, #tpu.memory_space<smem>>
    %c37 = arith.constant 37 : index
    %121 = memref.load %arg4[%c37] : memref<128xf32, #tpu.memory_space<smem>>
    %c69 = arith.constant 69 : index
    %122 = memref.load %arg4[%c69] : memref<128xf32, #tpu.memory_space<smem>>
    %c101 = arith.constant 101 : index
    %123 = memref.load %arg4[%c101] : memref<128xf32, #tpu.memory_space<smem>>
    %c5_16 = arith.constant 5 : index
    %124 = memref.load %arg5[%c5_16] : memref<32xf32, #tpu.memory_space<smem>>
    %125 = vector.broadcast %120 : f32 to vector<8x256xf32>
    %126 = arith.mulf %125, %9 : vector<8x256xf32>
    %127 = vector.broadcast %121 : f32 to vector<8x256xf32>
    %128 = arith.mulf %127, %10 : vector<8x256xf32>
    %129 = arith.addf %126, %128 : vector<8x256xf32>
    %130 = vector.broadcast %122 : f32 to vector<8x256xf32>
    %131 = arith.mulf %130, %12 : vector<8x256xf32>
    %132 = arith.addf %129, %131 : vector<8x256xf32>
    %133 = vector.broadcast %123 : f32 to vector<8x256xf32>
    %134 = arith.mulf %133, %13 : vector<8x256xf32>
    %135 = arith.addf %132, %134 : vector<8x256xf32>
    %136 = vector.broadcast %124 : f32 to vector<8x256xf32>
    %137 = arith.addf %135, %136 : vector<8x256xf32>
    %cst_17 = arith.constant 0.000000e+00 : f32
    %138 = vector.broadcast %cst_17 : f32 to vector<8x256xf32>
    %139 = arith.maximumf %137, %138 : vector<8x256xf32>
    %140 = arith.addf %119, %139 : vector<8x256xf32>
    %c6 = arith.constant 6 : index
    %141 = memref.load %arg4[%c6] : memref<128xf32, #tpu.memory_space<smem>>
    %c38 = arith.constant 38 : index
    %142 = memref.load %arg4[%c38] : memref<128xf32, #tpu.memory_space<smem>>
    %c70 = arith.constant 70 : index
    %143 = memref.load %arg4[%c70] : memref<128xf32, #tpu.memory_space<smem>>
    %c102 = arith.constant 102 : index
    %144 = memref.load %arg4[%c102] : memref<128xf32, #tpu.memory_space<smem>>
    %c6_18 = arith.constant 6 : index
    %145 = memref.load %arg5[%c6_18] : memref<32xf32, #tpu.memory_space<smem>>
    %146 = vector.broadcast %141 : f32 to vector<8x256xf32>
    %147 = arith.mulf %146, %9 : vector<8x256xf32>
    %148 = vector.broadcast %142 : f32 to vector<8x256xf32>
    %149 = arith.mulf %148, %10 : vector<8x256xf32>
    %150 = arith.addf %147, %149 : vector<8x256xf32>
    %151 = vector.broadcast %143 : f32 to vector<8x256xf32>
    %152 = arith.mulf %151, %12 : vector<8x256xf32>
    %153 = arith.addf %150, %152 : vector<8x256xf32>
    %154 = vector.broadcast %144 : f32 to vector<8x256xf32>
    %155 = arith.mulf %154, %13 : vector<8x256xf32>
    %156 = arith.addf %153, %155 : vector<8x256xf32>
    %157 = vector.broadcast %145 : f32 to vector<8x256xf32>
    %158 = arith.addf %156, %157 : vector<8x256xf32>
    %cst_19 = arith.constant 0.000000e+00 : f32
    %159 = vector.broadcast %cst_19 : f32 to vector<8x256xf32>
    %160 = arith.maximumf %158, %159 : vector<8x256xf32>
    %161 = arith.subf %140, %160 : vector<8x256xf32>
    %c7 = arith.constant 7 : index
    %162 = memref.load %arg4[%c7] : memref<128xf32, #tpu.memory_space<smem>>
    %c39 = arith.constant 39 : index
    %163 = memref.load %arg4[%c39] : memref<128xf32, #tpu.memory_space<smem>>
    %c71 = arith.constant 71 : index
    %164 = memref.load %arg4[%c71] : memref<128xf32, #tpu.memory_space<smem>>
    %c103 = arith.constant 103 : index
    %165 = memref.load %arg4[%c103] : memref<128xf32, #tpu.memory_space<smem>>
    %c7_20 = arith.constant 7 : index
    %166 = memref.load %arg5[%c7_20] : memref<32xf32, #tpu.memory_space<smem>>
    %167 = vector.broadcast %162 : f32 to vector<8x256xf32>
    %168 = arith.mulf %167, %9 : vector<8x256xf32>
    %169 = vector.broadcast %163 : f32 to vector<8x256xf32>
    %170 = arith.mulf %169, %10 : vector<8x256xf32>
    %171 = arith.addf %168, %170 : vector<8x256xf32>
    %172 = vector.broadcast %164 : f32 to vector<8x256xf32>
    %173 = arith.mulf %172, %12 : vector<8x256xf32>
    %174 = arith.addf %171, %173 : vector<8x256xf32>
    %175 = vector.broadcast %165 : f32 to vector<8x256xf32>
    %176 = arith.mulf %175, %13 : vector<8x256xf32>
    %177 = arith.addf %174, %176 : vector<8x256xf32>
    %178 = vector.broadcast %166 : f32 to vector<8x256xf32>
    %179 = arith.addf %177, %178 : vector<8x256xf32>
    %cst_21 = arith.constant 0.000000e+00 : f32
    %180 = vector.broadcast %cst_21 : f32 to vector<8x256xf32>
    %181 = arith.maximumf %179, %180 : vector<8x256xf32>
    %182 = arith.addf %161, %181 : vector<8x256xf32>
    %c8 = arith.constant 8 : index
    %183 = memref.load %arg4[%c8] : memref<128xf32, #tpu.memory_space<smem>>
    %c40 = arith.constant 40 : index
    %184 = memref.load %arg4[%c40] : memref<128xf32, #tpu.memory_space<smem>>
    %c72 = arith.constant 72 : index
    %185 = memref.load %arg4[%c72] : memref<128xf32, #tpu.memory_space<smem>>
    %c104 = arith.constant 104 : index
    %186 = memref.load %arg4[%c104] : memref<128xf32, #tpu.memory_space<smem>>
    %c8_22 = arith.constant 8 : index
    %187 = memref.load %arg5[%c8_22] : memref<32xf32, #tpu.memory_space<smem>>
    %188 = vector.broadcast %183 : f32 to vector<8x256xf32>
    %189 = arith.mulf %188, %9 : vector<8x256xf32>
    %190 = vector.broadcast %184 : f32 to vector<8x256xf32>
    %191 = arith.mulf %190, %10 : vector<8x256xf32>
    %192 = arith.addf %189, %191 : vector<8x256xf32>
    %193 = vector.broadcast %185 : f32 to vector<8x256xf32>
    %194 = arith.mulf %193, %12 : vector<8x256xf32>
    %195 = arith.addf %192, %194 : vector<8x256xf32>
    %196 = vector.broadcast %186 : f32 to vector<8x256xf32>
    %197 = arith.mulf %196, %13 : vector<8x256xf32>
    %198 = arith.addf %195, %197 : vector<8x256xf32>
    %199 = vector.broadcast %187 : f32 to vector<8x256xf32>
    %200 = arith.addf %198, %199 : vector<8x256xf32>
    %cst_23 = arith.constant 0.000000e+00 : f32
    %201 = vector.broadcast %cst_23 : f32 to vector<8x256xf32>
    %202 = arith.maximumf %200, %201 : vector<8x256xf32>
    %203 = arith.subf %182, %202 : vector<8x256xf32>
    %c9 = arith.constant 9 : index
    %204 = memref.load %arg4[%c9] : memref<128xf32, #tpu.memory_space<smem>>
    %c41 = arith.constant 41 : index
    %205 = memref.load %arg4[%c41] : memref<128xf32, #tpu.memory_space<smem>>
    %c73 = arith.constant 73 : index
    %206 = memref.load %arg4[%c73] : memref<128xf32, #tpu.memory_space<smem>>
    %c105 = arith.constant 105 : index
    %207 = memref.load %arg4[%c105] : memref<128xf32, #tpu.memory_space<smem>>
    %c9_24 = arith.constant 9 : index
    %208 = memref.load %arg5[%c9_24] : memref<32xf32, #tpu.memory_space<smem>>
    %209 = vector.broadcast %204 : f32 to vector<8x256xf32>
    %210 = arith.mulf %209, %9 : vector<8x256xf32>
    %211 = vector.broadcast %205 : f32 to vector<8x256xf32>
    %212 = arith.mulf %211, %10 : vector<8x256xf32>
    %213 = arith.addf %210, %212 : vector<8x256xf32>
    %214 = vector.broadcast %206 : f32 to vector<8x256xf32>
    %215 = arith.mulf %214, %12 : vector<8x256xf32>
    %216 = arith.addf %213, %215 : vector<8x256xf32>
    %217 = vector.broadcast %207 : f32 to vector<8x256xf32>
    %218 = arith.mulf %217, %13 : vector<8x256xf32>
    %219 = arith.addf %216, %218 : vector<8x256xf32>
    %220 = vector.broadcast %208 : f32 to vector<8x256xf32>
    %221 = arith.addf %219, %220 : vector<8x256xf32>
    %cst_25 = arith.constant 0.000000e+00 : f32
    %222 = vector.broadcast %cst_25 : f32 to vector<8x256xf32>
    %223 = arith.maximumf %221, %222 : vector<8x256xf32>
    %224 = arith.addf %203, %223 : vector<8x256xf32>
    %c10 = arith.constant 10 : index
    %225 = memref.load %arg4[%c10] : memref<128xf32, #tpu.memory_space<smem>>
    %c42 = arith.constant 42 : index
    %226 = memref.load %arg4[%c42] : memref<128xf32, #tpu.memory_space<smem>>
    %c74 = arith.constant 74 : index
    %227 = memref.load %arg4[%c74] : memref<128xf32, #tpu.memory_space<smem>>
    %c106 = arith.constant 106 : index
    %228 = memref.load %arg4[%c106] : memref<128xf32, #tpu.memory_space<smem>>
    %c10_26 = arith.constant 10 : index
    %229 = memref.load %arg5[%c10_26] : memref<32xf32, #tpu.memory_space<smem>>
    %230 = vector.broadcast %225 : f32 to vector<8x256xf32>
    %231 = arith.mulf %230, %9 : vector<8x256xf32>
    %232 = vector.broadcast %226 : f32 to vector<8x256xf32>
    %233 = arith.mulf %232, %10 : vector<8x256xf32>
    %234 = arith.addf %231, %233 : vector<8x256xf32>
    %235 = vector.broadcast %227 : f32 to vector<8x256xf32>
    %236 = arith.mulf %235, %12 : vector<8x256xf32>
    %237 = arith.addf %234, %236 : vector<8x256xf32>
    %238 = vector.broadcast %228 : f32 to vector<8x256xf32>
    %239 = arith.mulf %238, %13 : vector<8x256xf32>
    %240 = arith.addf %237, %239 : vector<8x256xf32>
    %241 = vector.broadcast %229 : f32 to vector<8x256xf32>
    %242 = arith.addf %240, %241 : vector<8x256xf32>
    %cst_27 = arith.constant 0.000000e+00 : f32
    %243 = vector.broadcast %cst_27 : f32 to vector<8x256xf32>
    %244 = arith.maximumf %242, %243 : vector<8x256xf32>
    %245 = arith.addf %224, %244 : vector<8x256xf32>
    %c11 = arith.constant 11 : index
    %246 = memref.load %arg4[%c11] : memref<128xf32, #tpu.memory_space<smem>>
    %c43 = arith.constant 43 : index
    %247 = memref.load %arg4[%c43] : memref<128xf32, #tpu.memory_space<smem>>
    %c75 = arith.constant 75 : index
    %248 = memref.load %arg4[%c75] : memref<128xf32, #tpu.memory_space<smem>>
    %c107 = arith.constant 107 : index
    %249 = memref.load %arg4[%c107] : memref<128xf32, #tpu.memory_space<smem>>
    %c11_28 = arith.constant 11 : index
    %250 = memref.load %arg5[%c11_28] : memref<32xf32, #tpu.memory_space<smem>>
    %251 = vector.broadcast %246 : f32 to vector<8x256xf32>
    %252 = arith.mulf %251, %9 : vector<8x256xf32>
    %253 = vector.broadcast %247 : f32 to vector<8x256xf32>
    %254 = arith.mulf %253, %10 : vector<8x256xf32>
    %255 = arith.addf %252, %254 : vector<8x256xf32>
    %256 = vector.broadcast %248 : f32 to vector<8x256xf32>
    %257 = arith.mulf %256, %12 : vector<8x256xf32>
    %258 = arith.addf %255, %257 : vector<8x256xf32>
    %259 = vector.broadcast %249 : f32 to vector<8x256xf32>
    %260 = arith.mulf %259, %13 : vector<8x256xf32>
    %261 = arith.addf %258, %260 : vector<8x256xf32>
    %262 = vector.broadcast %250 : f32 to vector<8x256xf32>
    %263 = arith.addf %261, %262 : vector<8x256xf32>
    %cst_29 = arith.constant 0.000000e+00 : f32
    %264 = vector.broadcast %cst_29 : f32 to vector<8x256xf32>
    %265 = arith.maximumf %263, %264 : vector<8x256xf32>
    %266 = arith.addf %245, %265 : vector<8x256xf32>
    %c12 = arith.constant 12 : index
    %267 = memref.load %arg4[%c12] : memref<128xf32, #tpu.memory_space<smem>>
    %c44 = arith.constant 44 : index
    %268 = memref.load %arg4[%c44] : memref<128xf32, #tpu.memory_space<smem>>
    %c76 = arith.constant 76 : index
    %269 = memref.load %arg4[%c76] : memref<128xf32, #tpu.memory_space<smem>>
    %c108 = arith.constant 108 : index
    %270 = memref.load %arg4[%c108] : memref<128xf32, #tpu.memory_space<smem>>
    %c12_30 = arith.constant 12 : index
    %271 = memref.load %arg5[%c12_30] : memref<32xf32, #tpu.memory_space<smem>>
    %272 = vector.broadcast %267 : f32 to vector<8x256xf32>
    %273 = arith.mulf %272, %9 : vector<8x256xf32>
    %274 = vector.broadcast %268 : f32 to vector<8x256xf32>
    %275 = arith.mulf %274, %10 : vector<8x256xf32>
    %276 = arith.addf %273, %275 : vector<8x256xf32>
    %277 = vector.broadcast %269 : f32 to vector<8x256xf32>
    %278 = arith.mulf %277, %12 : vector<8x256xf32>
    %279 = arith.addf %276, %278 : vector<8x256xf32>
    %280 = vector.broadcast %270 : f32 to vector<8x256xf32>
    %281 = arith.mulf %280, %13 : vector<8x256xf32>
    %282 = arith.addf %279, %281 : vector<8x256xf32>
    %283 = vector.broadcast %271 : f32 to vector<8x256xf32>
    %284 = arith.addf %282, %283 : vector<8x256xf32>
    %cst_31 = arith.constant 0.000000e+00 : f32
    %285 = vector.broadcast %cst_31 : f32 to vector<8x256xf32>
    %286 = arith.maximumf %284, %285 : vector<8x256xf32>
    %287 = arith.subf %266, %286 : vector<8x256xf32>
    %c13 = arith.constant 13 : index
    %288 = memref.load %arg4[%c13] : memref<128xf32, #tpu.memory_space<smem>>
    %c45 = arith.constant 45 : index
    %289 = memref.load %arg4[%c45] : memref<128xf32, #tpu.memory_space<smem>>
    %c77 = arith.constant 77 : index
    %290 = memref.load %arg4[%c77] : memref<128xf32, #tpu.memory_space<smem>>
    %c109 = arith.constant 109 : index
    %291 = memref.load %arg4[%c109] : memref<128xf32, #tpu.memory_space<smem>>
    %c13_32 = arith.constant 13 : index
    %292 = memref.load %arg5[%c13_32] : memref<32xf32, #tpu.memory_space<smem>>
    %293 = vector.broadcast %288 : f32 to vector<8x256xf32>
    %294 = arith.mulf %293, %9 : vector<8x256xf32>
    %295 = vector.broadcast %289 : f32 to vector<8x256xf32>
    %296 = arith.mulf %295, %10 : vector<8x256xf32>
    %297 = arith.addf %294, %296 : vector<8x256xf32>
    %298 = vector.broadcast %290 : f32 to vector<8x256xf32>
    %299 = arith.mulf %298, %12 : vector<8x256xf32>
    %300 = arith.addf %297, %299 : vector<8x256xf32>
    %301 = vector.broadcast %291 : f32 to vector<8x256xf32>
    %302 = arith.mulf %301, %13 : vector<8x256xf32>
    %303 = arith.addf %300, %302 : vector<8x256xf32>
    %304 = vector.broadcast %292 : f32 to vector<8x256xf32>
    %305 = arith.addf %303, %304 : vector<8x256xf32>
    %cst_33 = arith.constant 0.000000e+00 : f32
    %306 = vector.broadcast %cst_33 : f32 to vector<8x256xf32>
    %307 = arith.maximumf %305, %306 : vector<8x256xf32>
    %308 = arith.addf %287, %307 : vector<8x256xf32>
    %c14 = arith.constant 14 : index
    %309 = memref.load %arg4[%c14] : memref<128xf32, #tpu.memory_space<smem>>
    %c46 = arith.constant 46 : index
    %310 = memref.load %arg4[%c46] : memref<128xf32, #tpu.memory_space<smem>>
    %c78 = arith.constant 78 : index
    %311 = memref.load %arg4[%c78] : memref<128xf32, #tpu.memory_space<smem>>
    %c110 = arith.constant 110 : index
    %312 = memref.load %arg4[%c110] : memref<128xf32, #tpu.memory_space<smem>>
    %c14_34 = arith.constant 14 : index
    %313 = memref.load %arg5[%c14_34] : memref<32xf32, #tpu.memory_space<smem>>
    %314 = vector.broadcast %309 : f32 to vector<8x256xf32>
    %315 = arith.mulf %314, %9 : vector<8x256xf32>
    %316 = vector.broadcast %310 : f32 to vector<8x256xf32>
    %317 = arith.mulf %316, %10 : vector<8x256xf32>
    %318 = arith.addf %315, %317 : vector<8x256xf32>
    %319 = vector.broadcast %311 : f32 to vector<8x256xf32>
    %320 = arith.mulf %319, %12 : vector<8x256xf32>
    %321 = arith.addf %318, %320 : vector<8x256xf32>
    %322 = vector.broadcast %312 : f32 to vector<8x256xf32>
    %323 = arith.mulf %322, %13 : vector<8x256xf32>
    %324 = arith.addf %321, %323 : vector<8x256xf32>
    %325 = vector.broadcast %313 : f32 to vector<8x256xf32>
    %326 = arith.addf %324, %325 : vector<8x256xf32>
    %cst_35 = arith.constant 0.000000e+00 : f32
    %327 = vector.broadcast %cst_35 : f32 to vector<8x256xf32>
    %328 = arith.maximumf %326, %327 : vector<8x256xf32>
    %329 = arith.addf %308, %328 : vector<8x256xf32>
    %c15 = arith.constant 15 : index
    %330 = memref.load %arg4[%c15] : memref<128xf32, #tpu.memory_space<smem>>
    %c47 = arith.constant 47 : index
    %331 = memref.load %arg4[%c47] : memref<128xf32, #tpu.memory_space<smem>>
    %c79 = arith.constant 79 : index
    %332 = memref.load %arg4[%c79] : memref<128xf32, #tpu.memory_space<smem>>
    %c111 = arith.constant 111 : index
    %333 = memref.load %arg4[%c111] : memref<128xf32, #tpu.memory_space<smem>>
    %c15_36 = arith.constant 15 : index
    %334 = memref.load %arg5[%c15_36] : memref<32xf32, #tpu.memory_space<smem>>
    %335 = vector.broadcast %330 : f32 to vector<8x256xf32>
    %336 = arith.mulf %335, %9 : vector<8x256xf32>
    %337 = vector.broadcast %331 : f32 to vector<8x256xf32>
    %338 = arith.mulf %337, %10 : vector<8x256xf32>
    %339 = arith.addf %336, %338 : vector<8x256xf32>
    %340 = vector.broadcast %332 : f32 to vector<8x256xf32>
    %341 = arith.mulf %340, %12 : vector<8x256xf32>
    %342 = arith.addf %339, %341 : vector<8x256xf32>
    %343 = vector.broadcast %333 : f32 to vector<8x256xf32>
    %344 = arith.mulf %343, %13 : vector<8x256xf32>
    %345 = arith.addf %342, %344 : vector<8x256xf32>
    %346 = vector.broadcast %334 : f32 to vector<8x256xf32>
    %347 = arith.addf %345, %346 : vector<8x256xf32>
    %cst_37 = arith.constant 0.000000e+00 : f32
    %348 = vector.broadcast %cst_37 : f32 to vector<8x256xf32>
    %349 = arith.maximumf %347, %348 : vector<8x256xf32>
    %350 = arith.subf %329, %349 : vector<8x256xf32>
    %c16 = arith.constant 16 : index
    %351 = memref.load %arg4[%c16] : memref<128xf32, #tpu.memory_space<smem>>
    %c48 = arith.constant 48 : index
    %352 = memref.load %arg4[%c48] : memref<128xf32, #tpu.memory_space<smem>>
    %c80 = arith.constant 80 : index
    %353 = memref.load %arg4[%c80] : memref<128xf32, #tpu.memory_space<smem>>
    %c112 = arith.constant 112 : index
    %354 = memref.load %arg4[%c112] : memref<128xf32, #tpu.memory_space<smem>>
    %c16_38 = arith.constant 16 : index
    %355 = memref.load %arg5[%c16_38] : memref<32xf32, #tpu.memory_space<smem>>
    %356 = vector.broadcast %351 : f32 to vector<8x256xf32>
    %357 = arith.mulf %356, %9 : vector<8x256xf32>
    %358 = vector.broadcast %352 : f32 to vector<8x256xf32>
    %359 = arith.mulf %358, %10 : vector<8x256xf32>
    %360 = arith.addf %357, %359 : vector<8x256xf32>
    %361 = vector.broadcast %353 : f32 to vector<8x256xf32>
    %362 = arith.mulf %361, %12 : vector<8x256xf32>
    %363 = arith.addf %360, %362 : vector<8x256xf32>
    %364 = vector.broadcast %354 : f32 to vector<8x256xf32>
    %365 = arith.mulf %364, %13 : vector<8x256xf32>
    %366 = arith.addf %363, %365 : vector<8x256xf32>
    %367 = vector.broadcast %355 : f32 to vector<8x256xf32>
    %368 = arith.addf %366, %367 : vector<8x256xf32>
    %cst_39 = arith.constant 0.000000e+00 : f32
    %369 = vector.broadcast %cst_39 : f32 to vector<8x256xf32>
    %370 = arith.maximumf %368, %369 : vector<8x256xf32>
    %371 = arith.subf %350, %370 : vector<8x256xf32>
    %c17 = arith.constant 17 : index
    %372 = memref.load %arg4[%c17] : memref<128xf32, #tpu.memory_space<smem>>
    %c49 = arith.constant 49 : index
    %373 = memref.load %arg4[%c49] : memref<128xf32, #tpu.memory_space<smem>>
    %c81 = arith.constant 81 : index
    %374 = memref.load %arg4[%c81] : memref<128xf32, #tpu.memory_space<smem>>
    %c113 = arith.constant 113 : index
    %375 = memref.load %arg4[%c113] : memref<128xf32, #tpu.memory_space<smem>>
    %c17_40 = arith.constant 17 : index
    %376 = memref.load %arg5[%c17_40] : memref<32xf32, #tpu.memory_space<smem>>
    %377 = vector.broadcast %372 : f32 to vector<8x256xf32>
    %378 = arith.mulf %377, %9 : vector<8x256xf32>
    %379 = vector.broadcast %373 : f32 to vector<8x256xf32>
    %380 = arith.mulf %379, %10 : vector<8x256xf32>
    %381 = arith.addf %378, %380 : vector<8x256xf32>
    %382 = vector.broadcast %374 : f32 to vector<8x256xf32>
    %383 = arith.mulf %382, %12 : vector<8x256xf32>
    %384 = arith.addf %381, %383 : vector<8x256xf32>
    %385 = vector.broadcast %375 : f32 to vector<8x256xf32>
    %386 = arith.mulf %385, %13 : vector<8x256xf32>
    %387 = arith.addf %384, %386 : vector<8x256xf32>
    %388 = vector.broadcast %376 : f32 to vector<8x256xf32>
    %389 = arith.addf %387, %388 : vector<8x256xf32>
    %cst_41 = arith.constant 0.000000e+00 : f32
    %390 = vector.broadcast %cst_41 : f32 to vector<8x256xf32>
    %391 = arith.maximumf %389, %390 : vector<8x256xf32>
    %392 = arith.subf %371, %391 : vector<8x256xf32>
    %c18 = arith.constant 18 : index
    %393 = memref.load %arg4[%c18] : memref<128xf32, #tpu.memory_space<smem>>
    %c50 = arith.constant 50 : index
    %394 = memref.load %arg4[%c50] : memref<128xf32, #tpu.memory_space<smem>>
    %c82 = arith.constant 82 : index
    %395 = memref.load %arg4[%c82] : memref<128xf32, #tpu.memory_space<smem>>
    %c114 = arith.constant 114 : index
    %396 = memref.load %arg4[%c114] : memref<128xf32, #tpu.memory_space<smem>>
    %c18_42 = arith.constant 18 : index
    %397 = memref.load %arg5[%c18_42] : memref<32xf32, #tpu.memory_space<smem>>
    %398 = vector.broadcast %393 : f32 to vector<8x256xf32>
    %399 = arith.mulf %398, %9 : vector<8x256xf32>
    %400 = vector.broadcast %394 : f32 to vector<8x256xf32>
    %401 = arith.mulf %400, %10 : vector<8x256xf32>
    %402 = arith.addf %399, %401 : vector<8x256xf32>
    %403 = vector.broadcast %395 : f32 to vector<8x256xf32>
    %404 = arith.mulf %403, %12 : vector<8x256xf32>
    %405 = arith.addf %402, %404 : vector<8x256xf32>
    %406 = vector.broadcast %396 : f32 to vector<8x256xf32>
    %407 = arith.mulf %406, %13 : vector<8x256xf32>
    %408 = arith.addf %405, %407 : vector<8x256xf32>
    %409 = vector.broadcast %397 : f32 to vector<8x256xf32>
    %410 = arith.addf %408, %409 : vector<8x256xf32>
    %cst_43 = arith.constant 0.000000e+00 : f32
    %411 = vector.broadcast %cst_43 : f32 to vector<8x256xf32>
    %412 = arith.maximumf %410, %411 : vector<8x256xf32>
    %413 = arith.addf %392, %412 : vector<8x256xf32>
    %c19 = arith.constant 19 : index
    %414 = memref.load %arg4[%c19] : memref<128xf32, #tpu.memory_space<smem>>
    %c51 = arith.constant 51 : index
    %415 = memref.load %arg4[%c51] : memref<128xf32, #tpu.memory_space<smem>>
    %c83 = arith.constant 83 : index
    %416 = memref.load %arg4[%c83] : memref<128xf32, #tpu.memory_space<smem>>
    %c115 = arith.constant 115 : index
    %417 = memref.load %arg4[%c115] : memref<128xf32, #tpu.memory_space<smem>>
    %c19_44 = arith.constant 19 : index
    %418 = memref.load %arg5[%c19_44] : memref<32xf32, #tpu.memory_space<smem>>
    %419 = vector.broadcast %414 : f32 to vector<8x256xf32>
    %420 = arith.mulf %419, %9 : vector<8x256xf32>
    %421 = vector.broadcast %415 : f32 to vector<8x256xf32>
    %422 = arith.mulf %421, %10 : vector<8x256xf32>
    %423 = arith.addf %420, %422 : vector<8x256xf32>
    %424 = vector.broadcast %416 : f32 to vector<8x256xf32>
    %425 = arith.mulf %424, %12 : vector<8x256xf32>
    %426 = arith.addf %423, %425 : vector<8x256xf32>
    %427 = vector.broadcast %417 : f32 to vector<8x256xf32>
    %428 = arith.mulf %427, %13 : vector<8x256xf32>
    %429 = arith.addf %426, %428 : vector<8x256xf32>
    %430 = vector.broadcast %418 : f32 to vector<8x256xf32>
    %431 = arith.addf %429, %430 : vector<8x256xf32>
    %cst_45 = arith.constant 0.000000e+00 : f32
    %432 = vector.broadcast %cst_45 : f32 to vector<8x256xf32>
    %433 = arith.maximumf %431, %432 : vector<8x256xf32>
    %434 = arith.addf %413, %433 : vector<8x256xf32>
    %c20 = arith.constant 20 : index
    %435 = memref.load %arg4[%c20] : memref<128xf32, #tpu.memory_space<smem>>
    %c52 = arith.constant 52 : index
    %436 = memref.load %arg4[%c52] : memref<128xf32, #tpu.memory_space<smem>>
    %c84 = arith.constant 84 : index
    %437 = memref.load %arg4[%c84] : memref<128xf32, #tpu.memory_space<smem>>
    %c116 = arith.constant 116 : index
    %438 = memref.load %arg4[%c116] : memref<128xf32, #tpu.memory_space<smem>>
    %c20_46 = arith.constant 20 : index
    %439 = memref.load %arg5[%c20_46] : memref<32xf32, #tpu.memory_space<smem>>
    %440 = vector.broadcast %435 : f32 to vector<8x256xf32>
    %441 = arith.mulf %440, %9 : vector<8x256xf32>
    %442 = vector.broadcast %436 : f32 to vector<8x256xf32>
    %443 = arith.mulf %442, %10 : vector<8x256xf32>
    %444 = arith.addf %441, %443 : vector<8x256xf32>
    %445 = vector.broadcast %437 : f32 to vector<8x256xf32>
    %446 = arith.mulf %445, %12 : vector<8x256xf32>
    %447 = arith.addf %444, %446 : vector<8x256xf32>
    %448 = vector.broadcast %438 : f32 to vector<8x256xf32>
    %449 = arith.mulf %448, %13 : vector<8x256xf32>
    %450 = arith.addf %447, %449 : vector<8x256xf32>
    %451 = vector.broadcast %439 : f32 to vector<8x256xf32>
    %452 = arith.addf %450, %451 : vector<8x256xf32>
    %cst_47 = arith.constant 0.000000e+00 : f32
    %453 = vector.broadcast %cst_47 : f32 to vector<8x256xf32>
    %454 = arith.maximumf %452, %453 : vector<8x256xf32>
    %455 = arith.addf %434, %454 : vector<8x256xf32>
    %c21 = arith.constant 21 : index
    %456 = memref.load %arg4[%c21] : memref<128xf32, #tpu.memory_space<smem>>
    %c53 = arith.constant 53 : index
    %457 = memref.load %arg4[%c53] : memref<128xf32, #tpu.memory_space<smem>>
    %c85 = arith.constant 85 : index
    %458 = memref.load %arg4[%c85] : memref<128xf32, #tpu.memory_space<smem>>
    %c117 = arith.constant 117 : index
    %459 = memref.load %arg4[%c117] : memref<128xf32, #tpu.memory_space<smem>>
    %c21_48 = arith.constant 21 : index
    %460 = memref.load %arg5[%c21_48] : memref<32xf32, #tpu.memory_space<smem>>
    %461 = vector.broadcast %456 : f32 to vector<8x256xf32>
    %462 = arith.mulf %461, %9 : vector<8x256xf32>
    %463 = vector.broadcast %457 : f32 to vector<8x256xf32>
    %464 = arith.mulf %463, %10 : vector<8x256xf32>
    %465 = arith.addf %462, %464 : vector<8x256xf32>
    %466 = vector.broadcast %458 : f32 to vector<8x256xf32>
    %467 = arith.mulf %466, %12 : vector<8x256xf32>
    %468 = arith.addf %465, %467 : vector<8x256xf32>
    %469 = vector.broadcast %459 : f32 to vector<8x256xf32>
    %470 = arith.mulf %469, %13 : vector<8x256xf32>
    %471 = arith.addf %468, %470 : vector<8x256xf32>
    %472 = vector.broadcast %460 : f32 to vector<8x256xf32>
    %473 = arith.addf %471, %472 : vector<8x256xf32>
    %cst_49 = arith.constant 0.000000e+00 : f32
    %474 = vector.broadcast %cst_49 : f32 to vector<8x256xf32>
    %475 = arith.maximumf %473, %474 : vector<8x256xf32>
    %476 = arith.addf %455, %475 : vector<8x256xf32>
    %c22 = arith.constant 22 : index
    %477 = memref.load %arg4[%c22] : memref<128xf32, #tpu.memory_space<smem>>
    %c54 = arith.constant 54 : index
    %478 = memref.load %arg4[%c54] : memref<128xf32, #tpu.memory_space<smem>>
    %c86 = arith.constant 86 : index
    %479 = memref.load %arg4[%c86] : memref<128xf32, #tpu.memory_space<smem>>
    %c118 = arith.constant 118 : index
    %480 = memref.load %arg4[%c118] : memref<128xf32, #tpu.memory_space<smem>>
    %c22_50 = arith.constant 22 : index
    %481 = memref.load %arg5[%c22_50] : memref<32xf32, #tpu.memory_space<smem>>
    %482 = vector.broadcast %477 : f32 to vector<8x256xf32>
    %483 = arith.mulf %482, %9 : vector<8x256xf32>
    %484 = vector.broadcast %478 : f32 to vector<8x256xf32>
    %485 = arith.mulf %484, %10 : vector<8x256xf32>
    %486 = arith.addf %483, %485 : vector<8x256xf32>
    %487 = vector.broadcast %479 : f32 to vector<8x256xf32>
    %488 = arith.mulf %487, %12 : vector<8x256xf32>
    %489 = arith.addf %486, %488 : vector<8x256xf32>
    %490 = vector.broadcast %480 : f32 to vector<8x256xf32>
    %491 = arith.mulf %490, %13 : vector<8x256xf32>
    %492 = arith.addf %489, %491 : vector<8x256xf32>
    %493 = vector.broadcast %481 : f32 to vector<8x256xf32>
    %494 = arith.addf %492, %493 : vector<8x256xf32>
    %cst_51 = arith.constant 0.000000e+00 : f32
    %495 = vector.broadcast %cst_51 : f32 to vector<8x256xf32>
    %496 = arith.maximumf %494, %495 : vector<8x256xf32>
    %497 = arith.subf %476, %496 : vector<8x256xf32>
    %c23 = arith.constant 23 : index
    %498 = memref.load %arg4[%c23] : memref<128xf32, #tpu.memory_space<smem>>
    %c55 = arith.constant 55 : index
    %499 = memref.load %arg4[%c55] : memref<128xf32, #tpu.memory_space<smem>>
    %c87 = arith.constant 87 : index
    %500 = memref.load %arg4[%c87] : memref<128xf32, #tpu.memory_space<smem>>
    %c119 = arith.constant 119 : index
    %501 = memref.load %arg4[%c119] : memref<128xf32, #tpu.memory_space<smem>>
    %c23_52 = arith.constant 23 : index
    %502 = memref.load %arg5[%c23_52] : memref<32xf32, #tpu.memory_space<smem>>
    %503 = vector.broadcast %498 : f32 to vector<8x256xf32>
    %504 = arith.mulf %503, %9 : vector<8x256xf32>
    %505 = vector.broadcast %499 : f32 to vector<8x256xf32>
    %506 = arith.mulf %505, %10 : vector<8x256xf32>
    %507 = arith.addf %504, %506 : vector<8x256xf32>
    %508 = vector.broadcast %500 : f32 to vector<8x256xf32>
    %509 = arith.mulf %508, %12 : vector<8x256xf32>
    %510 = arith.addf %507, %509 : vector<8x256xf32>
    %511 = vector.broadcast %501 : f32 to vector<8x256xf32>
    %512 = arith.mulf %511, %13 : vector<8x256xf32>
    %513 = arith.addf %510, %512 : vector<8x256xf32>
    %514 = vector.broadcast %502 : f32 to vector<8x256xf32>
    %515 = arith.addf %513, %514 : vector<8x256xf32>
    %cst_53 = arith.constant 0.000000e+00 : f32
    %516 = vector.broadcast %cst_53 : f32 to vector<8x256xf32>
    %517 = arith.maximumf %515, %516 : vector<8x256xf32>
    %518 = arith.subf %497, %517 : vector<8x256xf32>
    %c24 = arith.constant 24 : index
    %519 = memref.load %arg4[%c24] : memref<128xf32, #tpu.memory_space<smem>>
    %c56 = arith.constant 56 : index
    %520 = memref.load %arg4[%c56] : memref<128xf32, #tpu.memory_space<smem>>
    %c88 = arith.constant 88 : index
    %521 = memref.load %arg4[%c88] : memref<128xf32, #tpu.memory_space<smem>>
    %c120 = arith.constant 120 : index
    %522 = memref.load %arg4[%c120] : memref<128xf32, #tpu.memory_space<smem>>
    %c24_54 = arith.constant 24 : index
    %523 = memref.load %arg5[%c24_54] : memref<32xf32, #tpu.memory_space<smem>>
    %524 = vector.broadcast %519 : f32 to vector<8x256xf32>
    %525 = arith.mulf %524, %9 : vector<8x256xf32>
    %526 = vector.broadcast %520 : f32 to vector<8x256xf32>
    %527 = arith.mulf %526, %10 : vector<8x256xf32>
    %528 = arith.addf %525, %527 : vector<8x256xf32>
    %529 = vector.broadcast %521 : f32 to vector<8x256xf32>
    %530 = arith.mulf %529, %12 : vector<8x256xf32>
    %531 = arith.addf %528, %530 : vector<8x256xf32>
    %532 = vector.broadcast %522 : f32 to vector<8x256xf32>
    %533 = arith.mulf %532, %13 : vector<8x256xf32>
    %534 = arith.addf %531, %533 : vector<8x256xf32>
    %535 = vector.broadcast %523 : f32 to vector<8x256xf32>
    %536 = arith.addf %534, %535 : vector<8x256xf32>
    %cst_55 = arith.constant 0.000000e+00 : f32
    %537 = vector.broadcast %cst_55 : f32 to vector<8x256xf32>
    %538 = arith.maximumf %536, %537 : vector<8x256xf32>
    %539 = arith.subf %518, %538 : vector<8x256xf32>
    %c25 = arith.constant 25 : index
    %540 = memref.load %arg4[%c25] : memref<128xf32, #tpu.memory_space<smem>>
    %c57 = arith.constant 57 : index
    %541 = memref.load %arg4[%c57] : memref<128xf32, #tpu.memory_space<smem>>
    %c89 = arith.constant 89 : index
    %542 = memref.load %arg4[%c89] : memref<128xf32, #tpu.memory_space<smem>>
    %c121 = arith.constant 121 : index
    %543 = memref.load %arg4[%c121] : memref<128xf32, #tpu.memory_space<smem>>
    %c25_56 = arith.constant 25 : index
    %544 = memref.load %arg5[%c25_56] : memref<32xf32, #tpu.memory_space<smem>>
    %545 = vector.broadcast %540 : f32 to vector<8x256xf32>
    %546 = arith.mulf %545, %9 : vector<8x256xf32>
    %547 = vector.broadcast %541 : f32 to vector<8x256xf32>
    %548 = arith.mulf %547, %10 : vector<8x256xf32>
    %549 = arith.addf %546, %548 : vector<8x256xf32>
    %550 = vector.broadcast %542 : f32 to vector<8x256xf32>
    %551 = arith.mulf %550, %12 : vector<8x256xf32>
    %552 = arith.addf %549, %551 : vector<8x256xf32>
    %553 = vector.broadcast %543 : f32 to vector<8x256xf32>
    %554 = arith.mulf %553, %13 : vector<8x256xf32>
    %555 = arith.addf %552, %554 : vector<8x256xf32>
    %556 = vector.broadcast %544 : f32 to vector<8x256xf32>
    %557 = arith.addf %555, %556 : vector<8x256xf32>
    %cst_57 = arith.constant 0.000000e+00 : f32
    %558 = vector.broadcast %cst_57 : f32 to vector<8x256xf32>
    %559 = arith.maximumf %557, %558 : vector<8x256xf32>
    %560 = arith.subf %539, %559 : vector<8x256xf32>
    %c26 = arith.constant 26 : index
    %561 = memref.load %arg4[%c26] : memref<128xf32, #tpu.memory_space<smem>>
    %c58 = arith.constant 58 : index
    %562 = memref.load %arg4[%c58] : memref<128xf32, #tpu.memory_space<smem>>
    %c90 = arith.constant 90 : index
    %563 = memref.load %arg4[%c90] : memref<128xf32, #tpu.memory_space<smem>>
    %c122 = arith.constant 122 : index
    %564 = memref.load %arg4[%c122] : memref<128xf32, #tpu.memory_space<smem>>
    %c26_58 = arith.constant 26 : index
    %565 = memref.load %arg5[%c26_58] : memref<32xf32, #tpu.memory_space<smem>>
    %566 = vector.broadcast %561 : f32 to vector<8x256xf32>
    %567 = arith.mulf %566, %9 : vector<8x256xf32>
    %568 = vector.broadcast %562 : f32 to vector<8x256xf32>
    %569 = arith.mulf %568, %10 : vector<8x256xf32>
    %570 = arith.addf %567, %569 : vector<8x256xf32>
    %571 = vector.broadcast %563 : f32 to vector<8x256xf32>
    %572 = arith.mulf %571, %12 : vector<8x256xf32>
    %573 = arith.addf %570, %572 : vector<8x256xf32>
    %574 = vector.broadcast %564 : f32 to vector<8x256xf32>
    %575 = arith.mulf %574, %13 : vector<8x256xf32>
    %576 = arith.addf %573, %575 : vector<8x256xf32>
    %577 = vector.broadcast %565 : f32 to vector<8x256xf32>
    %578 = arith.addf %576, %577 : vector<8x256xf32>
    %cst_59 = arith.constant 0.000000e+00 : f32
    %579 = vector.broadcast %cst_59 : f32 to vector<8x256xf32>
    %580 = arith.maximumf %578, %579 : vector<8x256xf32>
    %581 = arith.subf %560, %580 : vector<8x256xf32>
    %c27 = arith.constant 27 : index
    %582 = memref.load %arg4[%c27] : memref<128xf32, #tpu.memory_space<smem>>
    %c59 = arith.constant 59 : index
    %583 = memref.load %arg4[%c59] : memref<128xf32, #tpu.memory_space<smem>>
    %c91 = arith.constant 91 : index
    %584 = memref.load %arg4[%c91] : memref<128xf32, #tpu.memory_space<smem>>
    %c123 = arith.constant 123 : index
    %585 = memref.load %arg4[%c123] : memref<128xf32, #tpu.memory_space<smem>>
    %c27_60 = arith.constant 27 : index
    %586 = memref.load %arg5[%c27_60] : memref<32xf32, #tpu.memory_space<smem>>
    %587 = vector.broadcast %582 : f32 to vector<8x256xf32>
    %588 = arith.mulf %587, %9 : vector<8x256xf32>
    %589 = vector.broadcast %583 : f32 to vector<8x256xf32>
    %590 = arith.mulf %589, %10 : vector<8x256xf32>
    %591 = arith.addf %588, %590 : vector<8x256xf32>
    %592 = vector.broadcast %584 : f32 to vector<8x256xf32>
    %593 = arith.mulf %592, %12 : vector<8x256xf32>
    %594 = arith.addf %591, %593 : vector<8x256xf32>
    %595 = vector.broadcast %585 : f32 to vector<8x256xf32>
    %596 = arith.mulf %595, %13 : vector<8x256xf32>
    %597 = arith.addf %594, %596 : vector<8x256xf32>
    %598 = vector.broadcast %586 : f32 to vector<8x256xf32>
    %599 = arith.addf %597, %598 : vector<8x256xf32>
    %cst_61 = arith.constant 0.000000e+00 : f32
    %600 = vector.broadcast %cst_61 : f32 to vector<8x256xf32>
    %601 = arith.maximumf %599, %600 : vector<8x256xf32>
    %602 = arith.subf %581, %601 : vector<8x256xf32>
    %c28 = arith.constant 28 : index
    %603 = memref.load %arg4[%c28] : memref<128xf32, #tpu.memory_space<smem>>
    %c60 = arith.constant 60 : index
    %604 = memref.load %arg4[%c60] : memref<128xf32, #tpu.memory_space<smem>>
    %c92 = arith.constant 92 : index
    %605 = memref.load %arg4[%c92] : memref<128xf32, #tpu.memory_space<smem>>
    %c124 = arith.constant 124 : index
    %606 = memref.load %arg4[%c124] : memref<128xf32, #tpu.memory_space<smem>>
    %c28_62 = arith.constant 28 : index
    %607 = memref.load %arg5[%c28_62] : memref<32xf32, #tpu.memory_space<smem>>
    %608 = vector.broadcast %603 : f32 to vector<8x256xf32>
    %609 = arith.mulf %608, %9 : vector<8x256xf32>
    %610 = vector.broadcast %604 : f32 to vector<8x256xf32>
    %611 = arith.mulf %610, %10 : vector<8x256xf32>
    %612 = arith.addf %609, %611 : vector<8x256xf32>
    %613 = vector.broadcast %605 : f32 to vector<8x256xf32>
    %614 = arith.mulf %613, %12 : vector<8x256xf32>
    %615 = arith.addf %612, %614 : vector<8x256xf32>
    %616 = vector.broadcast %606 : f32 to vector<8x256xf32>
    %617 = arith.mulf %616, %13 : vector<8x256xf32>
    %618 = arith.addf %615, %617 : vector<8x256xf32>
    %619 = vector.broadcast %607 : f32 to vector<8x256xf32>
    %620 = arith.addf %618, %619 : vector<8x256xf32>
    %cst_63 = arith.constant 0.000000e+00 : f32
    %621 = vector.broadcast %cst_63 : f32 to vector<8x256xf32>
    %622 = arith.maximumf %620, %621 : vector<8x256xf32>
    %623 = arith.subf %602, %622 : vector<8x256xf32>
    %c29 = arith.constant 29 : index
    %624 = memref.load %arg4[%c29] : memref<128xf32, #tpu.memory_space<smem>>
    %c61 = arith.constant 61 : index
    %625 = memref.load %arg4[%c61] : memref<128xf32, #tpu.memory_space<smem>>
    %c93 = arith.constant 93 : index
    %626 = memref.load %arg4[%c93] : memref<128xf32, #tpu.memory_space<smem>>
    %c125 = arith.constant 125 : index
    %627 = memref.load %arg4[%c125] : memref<128xf32, #tpu.memory_space<smem>>
    %c29_64 = arith.constant 29 : index
    %628 = memref.load %arg5[%c29_64] : memref<32xf32, #tpu.memory_space<smem>>
    %629 = vector.broadcast %624 : f32 to vector<8x256xf32>
    %630 = arith.mulf %629, %9 : vector<8x256xf32>
    %631 = vector.broadcast %625 : f32 to vector<8x256xf32>
    %632 = arith.mulf %631, %10 : vector<8x256xf32>
    %633 = arith.addf %630, %632 : vector<8x256xf32>
    %634 = vector.broadcast %626 : f32 to vector<8x256xf32>
    %635 = arith.mulf %634, %12 : vector<8x256xf32>
    %636 = arith.addf %633, %635 : vector<8x256xf32>
    %637 = vector.broadcast %627 : f32 to vector<8x256xf32>
    %638 = arith.mulf %637, %13 : vector<8x256xf32>
    %639 = arith.addf %636, %638 : vector<8x256xf32>
    %640 = vector.broadcast %628 : f32 to vector<8x256xf32>
    %641 = arith.addf %639, %640 : vector<8x256xf32>
    %cst_65 = arith.constant 0.000000e+00 : f32
    %642 = vector.broadcast %cst_65 : f32 to vector<8x256xf32>
    %643 = arith.maximumf %641, %642 : vector<8x256xf32>
    %644 = arith.subf %623, %643 : vector<8x256xf32>
    %c30 = arith.constant 30 : index
    %645 = memref.load %arg4[%c30] : memref<128xf32, #tpu.memory_space<smem>>
    %c62 = arith.constant 62 : index
    %646 = memref.load %arg4[%c62] : memref<128xf32, #tpu.memory_space<smem>>
    %c94 = arith.constant 94 : index
    %647 = memref.load %arg4[%c94] : memref<128xf32, #tpu.memory_space<smem>>
    %c126 = arith.constant 126 : index
    %648 = memref.load %arg4[%c126] : memref<128xf32, #tpu.memory_space<smem>>
    %c30_66 = arith.constant 30 : index
    %649 = memref.load %arg5[%c30_66] : memref<32xf32, #tpu.memory_space<smem>>
    %650 = vector.broadcast %645 : f32 to vector<8x256xf32>
    %651 = arith.mulf %650, %9 : vector<8x256xf32>
    %652 = vector.broadcast %646 : f32 to vector<8x256xf32>
    %653 = arith.mulf %652, %10 : vector<8x256xf32>
    %654 = arith.addf %651, %653 : vector<8x256xf32>
    %655 = vector.broadcast %647 : f32 to vector<8x256xf32>
    %656 = arith.mulf %655, %12 : vector<8x256xf32>
    %657 = arith.addf %654, %656 : vector<8x256xf32>
    %658 = vector.broadcast %648 : f32 to vector<8x256xf32>
    %659 = arith.mulf %658, %13 : vector<8x256xf32>
    %660 = arith.addf %657, %659 : vector<8x256xf32>
    %661 = vector.broadcast %649 : f32 to vector<8x256xf32>
    %662 = arith.addf %660, %661 : vector<8x256xf32>
    %cst_67 = arith.constant 0.000000e+00 : f32
    %663 = vector.broadcast %cst_67 : f32 to vector<8x256xf32>
    %664 = arith.maximumf %662, %663 : vector<8x256xf32>
    %665 = arith.addf %644, %664 : vector<8x256xf32>
    %c31 = arith.constant 31 : index
    %666 = memref.load %arg4[%c31] : memref<128xf32, #tpu.memory_space<smem>>
    %c63 = arith.constant 63 : index
    %667 = memref.load %arg4[%c63] : memref<128xf32, #tpu.memory_space<smem>>
    %c95 = arith.constant 95 : index
    %668 = memref.load %arg4[%c95] : memref<128xf32, #tpu.memory_space<smem>>
    %c127 = arith.constant 127 : index
    %669 = memref.load %arg4[%c127] : memref<128xf32, #tpu.memory_space<smem>>
    %c31_68 = arith.constant 31 : index
    %670 = memref.load %arg5[%c31_68] : memref<32xf32, #tpu.memory_space<smem>>
    %671 = vector.broadcast %666 : f32 to vector<8x256xf32>
    %672 = arith.mulf %671, %9 : vector<8x256xf32>
    %673 = vector.broadcast %667 : f32 to vector<8x256xf32>
    %674 = arith.mulf %673, %10 : vector<8x256xf32>
    %675 = arith.addf %672, %674 : vector<8x256xf32>
    %676 = vector.broadcast %668 : f32 to vector<8x256xf32>
    %677 = arith.mulf %676, %12 : vector<8x256xf32>
    %678 = arith.addf %675, %677 : vector<8x256xf32>
    %679 = vector.broadcast %669 : f32 to vector<8x256xf32>
    %680 = arith.mulf %679, %13 : vector<8x256xf32>
    %681 = arith.addf %678, %680 : vector<8x256xf32>
    %682 = vector.broadcast %670 : f32 to vector<8x256xf32>
    %683 = arith.addf %681, %682 : vector<8x256xf32>
    %cst_69 = arith.constant 0.000000e+00 : f32
    %684 = vector.broadcast %cst_69 : f32 to vector<8x256xf32>
    %685 = arith.maximumf %683, %684 : vector<8x256xf32>
    %686 = arith.subf %665, %685 : vector<8x256xf32>
    %687 = vector.broadcast %1 : f32 to vector<8x256xf32>
    %688 = arith.addf %686, %687 : vector<8x256xf32>
    %cst_70 = arith.constant 0.000000e+00 : f32
    %689 = vector.broadcast %cst_70 : f32 to vector<8x256xf32>
    %690 = arith.maximumf %688, %689 : vector<8x256xf32>
    %691 = vector.broadcast %0 : vector<1x256xf32> to vector<8x256xf32>
    %692 = arith.mulf %690, %691 : vector<8x256xf32>
    %cst_71 = arith.constant dense<0.000000e+00> : vector<8xf32>
    %693 = vector.multi_reduction <add>, %692, %cst_71 [1] : vector<8x256xf32> to vector<8xf32>
    %694 = vector.shape_cast %693 : vector<8xf32> to vector<8x1xf32>
    %695 = vector.broadcast %2 : f32 to vector<8x1xf32>
    %696 = arith.addf %694, %695 : vector<8x1xf32>
    %697 = arith.negf %696 : vector<8x1xf32>
    %698 = math.exp %697 : vector<8x1xf32>
    %cst_72 = arith.constant 1.000000e+00 : f32
    %699 = vector.broadcast %cst_72 : f32 to vector<8x1xf32>
    %700 = arith.addf %699, %698 : vector<8x1xf32>
    %701 = arith.divf %699, %700 : vector<8x1xf32>
    %702 = arith.index_cast %4 : i32 to index
    %c0_73 = arith.constant 0 : index
    %703 = vector.load %arg8[%702, %c0_73] : memref<8x1xf32, #tpu.memory_space<vmem>>, vector<8x1xf32>
    tpu.vector_store %arg8[%702, %c0_73], %701 {strides = array<i32>} : memref<8x1xf32, #tpu.memory_space<vmem>>, vector<8x1xf32>,
    %c1_i32 = arith.constant 1 : i32
    return
  }
  func.func @transform_0(%arg0: i32) -> (i32, i32) {
    %c0_i32 = arith.constant 0 : i32
    %c0_i32_0 = arith.constant 0 : i32
    return %arg0, %c0_i32 : i32, i32
  }
  func.func @transform_1(%arg0: i32) -> (i32, i32) {
    %c0_i32 = arith.constant 0 : i32
    %c0_i32_0 = arith.constant 0 : i32
    return %arg0, %c0_i32 : i32, i32
  }
  func.func @transform_2(%arg0: i32) -> (i32, i32) {
    %c0_i32 = arith.constant 0 : i32
    %c0_i32_0 = arith.constant 0 : i32
    %c0_i32_1 = arith.constant 0 : i32
    return %c0_i32, %c0_i32_0 : i32, i32
  }
  func.func @transform_3(%arg0: i32) -> i32 {
    %c0_i32 = arith.constant 0 : i32
    %c0_i32_0 = arith.constant 0 : i32
    return %c0_i32 : i32
  }
  func.func @transform_4(%arg0: i32) -> i32 {
    %c0_i32 = arith.constant 0 : i32
    %c0_i32_0 = arith.constant 0 : i32
    return %c0_i32 : i32
  }
  func.func @transform_5(%arg0: i32) -> i32 {
    %c0_i32 = arith.constant 0 : i32
    %c0_i32_0 = arith.constant 0 : i32
    return %c0_i32 : i32
  }
  func.func @transform_6(%arg0: i32) -> i32 {
    %c0_i32 = arith.constant 0 : i32
    %c0_i32_0 = arith.constant 0 : i32
    return %c0_i32 : i32
  }
  func.func @transform_7(%arg0: i32) -> (i32, i32) {
    %c0_i32 = arith.constant 0 : i32
    %c0_i32_0 = arith.constant 0 : i32
    return %arg0, %c0_i32 : i32, i32
  }
}

</mosaic_0001>

<llo_original>
// kernel: tpu_custom_call.1
$region0: #{tpu_custom_call.1}
  #allocation0 [shape = 'u32[]', space=smem, size = 0x4, offset = 0x4, fixed_abs, tag = 'smem constant byte address 0x4 - core index']
  #allocation1 [shape = 'u32[72,128]{1,0:T(1,128)}', space=vmem, size = 0x9000, scoped, tag = 'internal scratch']
  #allocation2 [shape = 'f32[1]{0:T(128)S(6)}', space=smem, size = 0x200, scoped, tag = 'scoped memory for tpu_custom_call.1']
  #allocation3 [shape = 'f32[1]{0:T(128)S(6)}', space=smem, size = 0x200, scoped, tag = 'scoped memory for tpu_custom_call.1']
  %s0 = inlined_call_operand.hbm [shape: f32[16,256], index: 0, kind: input, shape index: {}]
  %s1 = inlined_call_operand.hbm [shape: f32[16,256], index: 1, kind: input, shape index: {}]
  %s2 = inlined_call_operand.vmem [shape: f32[1,256], index: 2, kind: input, shape index: {}]
  %s3 = inlined_call_operand.vmem [shape: f32[128], index: 3, kind: input, shape index: {}]
  %s4 = inlined_call_operand.vmem [shape: f32[32], index: 4, kind: input, shape index: {}]
  %s5 = inlined_call_operand.<no memory space> [shape: f32[1], index: 5, kind: input, shape index: {}]
  %s6 = inlined_call_operand.<no memory space> [shape: f32[1], index: 6, kind: input, shape index: {}]
  %s7 = inlined_call_operand.vmem [shape: f32[16,1], index: 7, kind: output, shape index: {}]
  %s8 = sld [smem:[#allocation0]]
  $region77: #{tpu_custom_call.1} parent=0
    _
  %s10 = ssub.s32 1, %s8
  %s11 = scalar_select 0, %s10, %s8
  %12 = sst [smem:[#allocation2]] %s5
  %13 = sst [smem:[#allocation3]] %s6
  $region1: #{tpu_custom_call.1} parent=0
    #allocation4 [shape = 'u8[16384]{0}', space=vmem, size = 0x4000, scoped, tag = 'input window, operand 0']
    #allocation5 [shape = 's32[2]{0}', space=sflag, size = 0x8, scoped, tag = 'scoped memory for tpu_custom_call.1']
    #allocation6 [shape = 's32[2]{0}', space=sflag, size = 0x8, scoped, tag = 'scoped memory for tpu_custom_call.1']
    #allocation7 [shape = 'u8[16384]{0}', space=vmem, size = 0x4000, scoped, tag = 'input window, operand 1']
    #allocation8 [shape = 's32[2]{0}', space=sflag, size = 0x8, scoped, tag = 'scoped memory for tpu_custom_call.1']
    #allocation9 [shape = 'u8[512]{0}', space=smem, size = 0x200, scoped, tag = 'input window, operand 3, single buffered']
    #allocation10 [shape = 'u8[512]{0}', space=smem, size = 0x200, scoped, tag = 'input window, operand 4, single buffered']
    #allocation11 [shape = 's32[1]{0}', space=sflag, size = 0x4, scoped, tag = 'scoped memory for tpu_custom_call.1']
    %14 = vsyncpa [#allocation5], 0
    %s15 = scalar_lea.sflag [#allocation5], 1
    %16 = vsyncpa %s15, 0
    %17 = vsyncpa [#allocation8], 0
    %s18 = scalar_lea.sflag [#allocation8], 1
    %19 = vsyncpa %s18, 0
    %20 = vsyncpa [#allocation6], 0
    %21 = vsyncpa [#allocation11], 0
    loop: start=0, step=1, limit=4
    $region2: #{tpu_custom_call.1} parent=1 // loop_pre_header
      _
    $region3: #{tpu_custom_call.1} parent=1 // loop_header
      %s23 = sphi 0, %s27
      %p24 = scmp.ge.s32.totalorder %s23, 4
      %s33 = sphi 0, %s35
      %s36 = sphi 0, %s33
      %s37 = sphi 0, %s36
      %s53 = sphi 0, %s37
      %s59 = sphi 0, %s61
      %s62 = sphi 0, %s59
      %s63 = sphi 0, %s62
      %s79 = sphi 0, %s63
      %s83 = sphi 0, %s83
      %s85 = sphi 0, %s83
      %s86 = sphi 0, %s85
      %s100 = sphi 0, %s86
      %s104 = sphi 0, %s104
      %s106 = sphi 0, %s104
      %s107 = sphi 0, %s106
      %s121 = sphi 0, %s107
      %s125 = sphi 0, %s125
      %s127 = sphi 0, %s125
      %s128 = sphi 0, %s127
      %s142 = sphi 0, %s128
      %s146 = sphi 0, %s146
      %s148 = sphi 0, %s146
      %s149 = sphi 0, %s148
      %s163 = sphi 0, %s149
      %s167 = sphi 0, %s167
      %s169 = sphi 0, %s167
      %s170 = sphi 0, %s169
      %s184 = sphi 0, %s170
      %s190 = sphi 0, %s192
      %s193 = sphi 0, %s190
      %s194 = sphi 0, %s193
      %s210 = sphi 0, %s194
    $region4: #{tpu_custom_call.1} parent=1 // loop_header_branch
      %26 = sbr.rel (%p24) target = $region8
    $region5: #{tpu_custom_call.1} parent=1 // loop_body
      %s28 = ssub.s32 %s23, 1
      %s29 = ssub.s32 %s23, 2
      %s30 = sadd.s32 %s23, 1
      %s31 = ssub.s32 %s23, %s30
      %p32 = scmp.eq.s32.totalorder %s31, 0
      %s34 = sadd.s32 %s33, 1
      %s35 = scalar_select %p32, %s33, %s34
      %p38 = pneg %p32
      %p39 = scmp.eq.s32.totalorder %s23, 1
      %p40 = por %p38, %p39
      %p41 = scmp.ne.s32.totalorder %s33, %s36
      %p42 = scmp.eq.s32.totalorder %s23, 0
      %p43 = por %p41, %p42
      %p44 = scmp.ne.s32.totalorder %s33, %s36
      %p45 = scmp.eq.s32.totalorder %s28, 1
      %p46 = por %p44, %p45
      %p47 = scmp.ne.s32.totalorder %s36, %s37
      %p48 = scmp.eq.s32.totalorder %s28, 0
      %p49 = por %p47, %p48
      %p50 = scmp.ne.s32.totalorder %s36, %s37
      %p51 = scmp.eq.s32.totalorder %s29, 1
      %p52 = por %p50, %p51
      %p54 = scmp.ne.s32.totalorder %s37, %s53
      %p55 = scmp.eq.s32.totalorder %s29, 0
      %p56 = por %p54, %p55
      %s57 = ssub.s32 %s23, %s30
      %p58 = scmp.eq.s32.totalorder %s57, 0
      %s60 = sadd.s32 %s59, 1
      %s61 = scalar_select %p58, %s59, %s60
      %p64 = pneg %p58
      %p65 = scmp.eq.s32.totalorder %s23, 1
      %p66 = por %p64, %p65
      %p67 = scmp.ne.s32.totalorder %s59, %s62
      %p68 = scmp.eq.s32.totalorder %s23, 0
      %p69 = por %p67, %p68
      %p70 = scmp.ne.s32.totalorder %s59, %s62
      %p71 = scmp.eq.s32.totalorder %s28, 1
      %p72 = por %p70, %p71
      %p73 = scmp.ne.s32.totalorder %s62, %s63
      %p74 = scmp.eq.s32.totalorder %s28, 0
      %p75 = por %p73, %p74
      %p76 = scmp.ne.s32.totalorder %s62, %s63
      %p77 = scmp.eq.s32.totalorder %s29, 1
      %p78 = por %p76, %p77
      %p80 = scmp.ne.s32.totalorder %s63, %s79
      %p81 = scmp.eq.s32.totalorder %s29, 0
      %p82 = por %p80, %p81
      %s84 = sadd.s32 %s83, 1
      %p87 = scmp.eq.s32.totalorder %s23, 1
      %p88 = scmp.ne.s32.totalorder %s83, %s85
      %p89 = scmp.eq.s32.totalorder %s23, 0
      %p90 = por %p88, %p89
      %p91 = scmp.ne.s32.totalorder %s83, %s85
      %p92 = scmp.eq.s32.totalorder %s28, 1
      %p93 = por %p91, %p92
      %p94 = scmp.ne.s32.totalorder %s85, %s86
      %p95 = scmp.eq.s32.totalorder %s28, 0
      %p96 = por %p94, %p95
      %p97 = scmp.ne.s32.totalorder %s85, %s86
      %p98 = scmp.eq.s32.totalorder %s29, 1
      %p99 = por %p97, %p98
      %p101 = scmp.ne.s32.totalorder %s86, %s100
      %p102 = scmp.eq.s32.totalorder %s29, 0
      %p103 = por %p101, %p102
      %s105 = sadd.s32 %s104, 1
      %p108 = scmp.eq.s32.totalorder %s23, 1
      %p109 = scmp.ne.s32.totalorder %s104, %s106
      %p110 = scmp.eq.s32.totalorder %s23, 0
      %p111 = por %p109, %p110
      %p112 = scmp.ne.s32.totalorder %s104, %s106
      %p113 = scmp.eq.s32.totalorder %s28, 1
      %p114 = por %p112, %p113
      %p115 = scmp.ne.s32.totalorder %s106, %s107
      %p116 = scmp.eq.s32.totalorder %s28, 0
      %p117 = por %p115, %p116
      %p118 = scmp.ne.s32.totalorder %s106, %s107
      %p119 = scmp.eq.s32.totalorder %s29, 1
      %p120 = por %p118, %p119
      %p122 = scmp.ne.s32.totalorder %s107, %s121
      %p123 = scmp.eq.s32.totalorder %s29, 0
      %p124 = por %p122, %p123
      %s126 = sadd.s32 %s125, 1
      %p129 = scmp.eq.s32.totalorder %s23, 1
      %p130 = scmp.ne.s32.totalorder %s125, %s127
      %p131 = scmp.eq.s32.totalorder %s23, 0
      %p132 = por %p130, %p131
      %p133 = scmp.ne.s32.totalorder %s125, %s127
      %p134 = scmp.eq.s32.totalorder %s28, 1
      %p135 = por %p133, %p134
      %p136 = scmp.ne.s32.totalorder %s127, %s128
      %p137 = scmp.eq.s32.totalorder %s28, 0
      %p138 = por %p136, %p137
      %p139 = scmp.ne.s32.totalorder %s127, %s128
      %p140 = scmp.eq.s32.totalorder %s29, 1
      %p141 = por %p139, %p140
      %p143 = scmp.ne.s32.totalorder %s128, %s142
      %p144 = scmp.eq.s32.totalorder %s29, 0
      %p145 = por %p143, %p144
      %s147 = sadd.s32 %s146, 1
      %p150 = scmp.eq.s32.totalorder %s23, 1
      %p151 = scmp.ne.s32.totalorder %s146, %s148
      %p152 = scmp.eq.s32.totalorder %s23, 0
      %p153 = por %p151, %p152
      %p154 = scmp.ne.s32.totalorder %s146, %s148
      %p155 = scmp.eq.s32.totalorder %s28, 1
      %p156 = por %p154, %p155
      %p157 = scmp.ne.s32.totalorder %s148, %s149
      %p158 = scmp.eq.s32.totalorder %s28, 0
      %p159 = por %p157, %p158
      %p160 = scmp.ne.s32.totalorder %s148, %s149
      %p161 = scmp.eq.s32.totalorder %s29, 1
      %p162 = por %p160, %p161
      %p164 = scmp.ne.s32.totalorder %s149, %s163
      %p165 = scmp.eq.s32.totalorder %s29, 0
      %p166 = por %p164, %p165
      %s168 = sadd.s32 %s167, 1
      %p171 = scmp.eq.s32.totalorder %s23, 1
      %p172 = scmp.ne.s32.totalorder %s167, %s169
      %p173 = scmp.eq.s32.totalorder %s23, 0
      %p174 = por %p172, %p173
      %p175 = scmp.ne.s32.totalorder %s167, %s169
      %p176 = scmp.eq.s32.totalorder %s28, 1
      %p177 = por %p175, %p176
      %p178 = scmp.ne.s32.totalorder %s169, %s170
      %p179 = scmp.eq.s32.totalorder %s28, 0
      %p180 = por %p178, %p179
      %p181 = scmp.ne.s32.totalorder %s169, %s170
      %p182 = scmp.eq.s32.totalorder %s29, 1
      %p183 = por %p181, %p182
      %p185 = scmp.ne.s32.totalorder %s170, %s184
      %p186 = scmp.eq.s32.totalorder %s29, 0
      %p187 = por %p185, %p186
      %s188 = ssub.s32 %s23, %s30
      %p189 = scmp.eq.s32.totalorder %s188, 0
      %s191 = sadd.s32 %s190, 1
      %s192 = scalar_select %p189, %s190, %s191
      %p195 = pneg %p189
      %p196 = scmp.eq.s32.totalorder %s23, 1
      %p197 = por %p195, %p196
      %p198 = scmp.ne.s32.totalorder %s190, %s193
      %p199 = scmp.eq.s32.totalorder %s23, 0
      %p200 = por %p198, %p199
      %p201 = scmp.ne.s32.totalorder %s190, %s193
      %p202 = scmp.eq.s32.totalorder %s28, 1
      %p203 = por %p201, %p202
      %p204 = scmp.ne.s32.totalorder %s193, %s194
      %p205 = scmp.eq.s32.totalorder %s28, 0
      %p206 = por %p204, %p205
      %p207 = scmp.ne.s32.totalorder %s193, %s194
      %p208 = scmp.eq.s32.totalorder %s29, 1
      %p209 = por %p207, %p208
      %p211 = scmp.ne.s32.totalorder %s194, %s210
      %p212 = scmp.eq.s32.totalorder %s29, 0
      %p213 = por %p211, %p212
      %p214 = scmp.le.s32.totalorder 1, %s23
      %p215 = scmp.lt.s32.totalorder %s23, 3
      %p216 = pnand %p214, %p215
      %p217 = pneg %p216
      // Predicated region
      $region9: #{tpu_custom_call.1} parent=5 // pred_check
        _
      $region10: #{tpu_custom_call.1} parent=5 // pred_check_branch
        %219 = sbr.rel (%p216) target = $region12
      $region11: #{tpu_custom_call.1} parent=5 // pred_region
        %s220 = ssub.s32 %s23, 1
        // Predicated region
        $region13: #{tpu_custom_call.1} parent=11 // pred_check
          %p221 = pneg %p96
        $region14: #{tpu_custom_call.1} parent=11 // pred_check_branch
          %223 = sbr.rel (%p221) target = $region16
        $region15: #{tpu_custom_call.1} parent=11 // pred_region
          _
        $region16: #{tpu_custom_call.1} parent=11 // pred_fallthru
          _
        // Predicated region
        $region17: #{tpu_custom_call.1} parent=11 // pred_check
          %p224 = pneg %p117
        $region18: #{tpu_custom_call.1} parent=11 // pred_check_branch
          %226 = sbr.rel (%p224) target = $region20
        $region19: #{tpu_custom_call.1} parent=11 // pred_region
          %228 = vsyncadd [#allocation6], 0
          %s230 = sshll.u32 %s3, 4
          %s231 = int_to_ptr.vmem [resolvable:$true] %s230
          %233 = dma.vmem_to_smem %s231, 16, [#allocation9], [#allocation6]
        $region20: #{tpu_custom_call.1} parent=11 // pred_fallthru
          _
        // Predicated region
        $region21: #{tpu_custom_call.1} parent=11 // pred_check
          %p234 = pneg %p138
        $region22: #{tpu_custom_call.1} parent=11 // pred_check_branch
          %236 = sbr.rel (%p234) target = $region24
        $region23: #{tpu_custom_call.1} parent=11 // pred_region
          %238 = vsyncadd [#allocation11], 0
          %s240 = sshll.u32 %s4, 4
          %s241 = int_to_ptr.vmem [resolvable:$true] %s240
          %243 = dma.vmem_to_smem %s241, 16, [#allocation10], [#allocation11]
        $region24: #{tpu_custom_call.1} parent=11 // pred_fallthru
          _
        // Predicated region
        $region25: #{tpu_custom_call.1} parent=11 // pred_check
          %p244 = pneg %p159
        $region26: #{tpu_custom_call.1} parent=11 // pred_check_branch
          %246 = sbr.rel (%p244) target = $region28
        $region27: #{tpu_custom_call.1} parent=11 // pred_region
          _
        $region28: #{tpu_custom_call.1} parent=11 // pred_fallthru
          _
        // Predicated region
        $region29: #{tpu_custom_call.1} parent=11 // pred_check
          %p247 = pneg %p180
        $region30: #{tpu_custom_call.1} parent=11 // pred_check_branch
          %249 = sbr.rel (%p247) target = $region32
        $region31: #{tpu_custom_call.1} parent=11 // pred_region
          _
        $region32: #{tpu_custom_call.1} parent=11 // pred_fallthru
          _
      $region12: #{tpu_custom_call.1} parent=5 // pred_fallthru
        _
      %p250 = scmp.lt.s32.totalorder %s23, 2
      // Predicated region
      $region33: #{tpu_custom_call.1} parent=5 // pred_check
        %p251 = pneg %p250
      $region34: #{tpu_custom_call.1} parent=5 // pred_check_branch
        %253 = sbr.rel (%p251) target = $region36
      $region35: #{tpu_custom_call.1} parent=5 // pred_region
        // Predicated region
        $region37: #{tpu_custom_call.1} parent=35 // pred_check
          %p254 = pneg %p43
        $region38: #{tpu_custom_call.1} parent=35 // pred_check_branch
          %256 = sbr.rel (%p254) target = $region40
        $region39: #{tpu_custom_call.1} parent=35 // pred_region
          %s257 = sand.u32 %s33, 1
          %s258 = scalar_lea.sflag [#allocation5], %s257
          %s259 = sand.u32 %s33, 1
          %s260 = smul.addr %s259, 16
          %s261 = scalar_lea.vmem [#allocation4], %s260
          %263 = vsyncadd %s258, 0
          %s264 = smul.addr %s23, 2
          %s265 = smul.addr %s264, 8
          %s266 = scalar_lea.hbm %s0, %s265
          %s268 = sshll.u32 %s266, 4
          %s269 = int_to_ptr.hbm [resolvable:$true] %s268
          %s270 = sshll.u32 %s261, 4
          %s271 = int_to_ptr.vmem [resolvable:$true] %s270
          %273 = dma.hbm_to_vmem [thread:$0]  %s269, 256, %s271, %s258
        $region40: #{tpu_custom_call.1} parent=35 // pred_fallthru
          _
        // Predicated region
        $region41: #{tpu_custom_call.1} parent=35 // pred_check
          %p274 = pneg %p69
        $region42: #{tpu_custom_call.1} parent=35 // pred_check_branch
          %276 = sbr.rel (%p274) target = $region44
        $region43: #{tpu_custom_call.1} parent=35 // pred_region
          %s277 = sand.u32 %s59, 1
          %s278 = scalar_lea.sflag [#allocation8], %s277
          %s279 = sand.u32 %s59, 1
          %s280 = smul.addr %s279, 16
          %s281 = scalar_lea.vmem [#allocation7], %s280
          %283 = vsyncadd %s278, 0
          %s284 = smul.addr %s23, 2
          %s285 = smul.addr %s284, 8
          %s286 = scalar_lea.hbm %s1, %s285
          %s288 = sshll.u32 %s286, 4
          %s289 = int_to_ptr.hbm [resolvable:$true] %s288
          %s290 = sshll.u32 %s281, 4
          %s291 = int_to_ptr.vmem [resolvable:$true] %s290
          %293 = dma.hbm_to_vmem [thread:$0]  %s289, 256, %s291, %s278
        $region44: #{tpu_custom_call.1} parent=35 // pred_fallthru
          _
      $region36: #{tpu_custom_call.1} parent=5 // pred_fallthru
        _
      %p294 = scmp.le.s32.totalorder 1, %s23
      %p295 = scmp.lt.s32.totalorder %s23, 3
      %p296 = pnand %p294, %p295
      %p297 = pneg %p296
      // Predicated region
      $region45: #{tpu_custom_call.1} parent=5 // pred_check
        _
      $region46: #{tpu_custom_call.1} parent=5 // pred_check_branch
        %299 = sbr.rel (%p296) target = $region48
      $region47: #{tpu_custom_call.1} parent=5 // pred_region
        %s300 = ssub.s32 %s23, 1
        %s301 = sand.u32 %s36, 1
        %s302 = scalar_lea.sflag [#allocation5], %s301
        %s303 = sand.u32 %s36, 1
        %s304 = smul.addr %s303, 16
        %s305 = scalar_lea.vmem [#allocation4], %s304
        // Predicated region
        $region49: #{tpu_custom_call.1} parent=47 // pred_check
          %p306 = pneg %p49
        $region50: #{tpu_custom_call.1} parent=47 // pred_check_branch
          %308 = sbr.rel (%p306) target = $region52
        $region51: #{tpu_custom_call.1} parent=47 // pred_region
          %310 = dma.done %s302, 256
        $region52: #{tpu_custom_call.1} parent=47 // pred_fallthru
          _
        %s311 = sand.u32 %s62, 1
        %s312 = scalar_lea.sflag [#allocation8], %s311
        %s313 = sand.u32 %s62, 1
        %s314 = smul.addr %s313, 16
        %s315 = scalar_lea.vmem [#allocation7], %s314
        // Predicated region
        $region53: #{tpu_custom_call.1} parent=47 // pred_check
          %p316 = pneg %p75
        $region54: #{tpu_custom_call.1} parent=47 // pred_check_branch
          %318 = sbr.rel (%p316) target = $region56
        $region55: #{tpu_custom_call.1} parent=47 // pred_region
          %320 = dma.done %s312, 256
        $region56: #{tpu_custom_call.1} parent=47 // pred_fallthru
          _
        // Predicated region
        $region57: #{tpu_custom_call.1} parent=47 // pred_check
          %p321 = pneg %p117
        $region58: #{tpu_custom_call.1} parent=47 // pred_check_branch
          %323 = sbr.rel (%p321) target = $region60
        $region59: #{tpu_custom_call.1} parent=47 // pred_region
          %325 = dma.done [#allocation6], 16
        $region60: #{tpu_custom_call.1} parent=47 // pred_fallthru
          _
        // Predicated region
        $region61: #{tpu_custom_call.1} parent=47 // pred_check
          %p326 = pneg %p138
        $region62: #{tpu_custom_call.1} parent=47 // pred_check_branch
          %328 = sbr.rel (%p326) target = $region64
        $region63: #{tpu_custom_call.1} parent=47 // pred_region
          %330 = dma.done [#allocation11], 16
        $region64: #{tpu_custom_call.1} parent=47 // pred_fallthru
          _
        %331 = sfence
        %s332 = sand.u32 %s36, 1
        %s333 = scalar_lea.sflag [#allocation5], %s332
        %s334 = sand.u32 %s36, 1
        %s335 = smul.addr %s334, 16
        %s336 = scalar_lea.vmem [#allocation4], %s335
        %p337 = pneg %p49
        %p338 = pneg %p46
        %s339 = sand.u32 %s62, 1
        %s340 = scalar_lea.sflag [#allocation8], %s339
        %s341 = sand.u32 %s62, 1
        %s342 = smul.addr %s341, 16
        %s343 = scalar_lea.vmem [#allocation7], %s342
        %p344 = pneg %p75
        %p345 = pneg %p72
        %p346 = pneg %p96
        %p347 = pneg %p93
        %p348 = pneg %p117
        %p349 = pneg %p114
        %p350 = pneg %p138
        %p351 = pneg %p135
        %p352 = pneg %p159
        %p353 = pneg %p156
        %p354 = pneg %p180
        %p355 = pneg %p177
        %p356 = pneg %p206
        %p357 = pneg %p203
        %p358 = scmp.lt.s32.totalorder %s28, 1
        %s359 = scalar_select %p358, %s28, 1
        %s360 = smul.addr %s359, 8
        %s361 = scalar_lea.vmem %s7, %s360
        %p362 = scmp.lt.s32.totalorder %s28, 1
        %s363 = scalar_select %p362, %s28, 1
        %s364 = smul.addr %s363, 8
        %s365 = scalar_lea.vmem %s7, %s364
        %v366 = vld [vmem:[%s2] sm:$0x3]
        %s367 = sld [smem:[#allocation2]]
        %s368 = sld [smem:[#allocation3]]
        %s369 = smul.u32 0, 2
        %s370 = smul.addr %s369, 8
        %s371 = scalar_lea.vmem %s305, %s370 [#allocation4]
        %v372 = vld [vmem:[%s371] sm:$0xff]
        %v373 = vld [vmem:[%s371 + $0x8] sm:$0xff]
        %s374 = smul.addr %s369, 8
        %s375 = scalar_lea.vmem %s315, %s374 [#allocation7]
        %v376 = vld [vmem:[%s375] sm:$0xff]
        %v377 = vld [vmem:[%s375 + $0x8] sm:$0xff]
        %v378 = vmul.f32 %v372, %v376
        %v379 = vmul.f32 %v373, %v377
        %v380 = vadd.f32 %v372, %v376
        %v381 = vadd.f32 %v373, %v377
        %v382 = vsub.f32 %v372, %v376
        %v383 = vsub.f32 %v373, %v377
        %v384 = vand.u32 2147483647, %v382
        %v385 = vand.u32 2147483647, %v383
        %v386 = vmul.f32 %v384, %v384
        %v387 = vmul.f32 %v385, %v385
        %s388 = sld [smem:[#allocation9]]
        %s389 = sld [smem:[#allocation9 + $0x20]]
        %s390 = sld [smem:[#allocation9 + $0x40]]
        %s391 = sld [smem:[#allocation9 + $0x60]]
        %s392 = sld [smem:[#allocation10]]
        %v393 = vstv %s388
        %v394 = vmul.f32 %v393, %v378
        %v395 = vmul.f32 %v393, %v379
        %v396 = vstv %s389
        %v397 = vmul.f32 %v396, %v380
        %v398 = vmul.f32 %v396, %v381
        %v399 = vadd.f32 %v394, %v397
        %v400 = vadd.f32 %v395, %v398
        %v401 = vstv %s390
        %v402 = vmul.f32 %v401, %v384
        %v403 = vmul.f32 %v401, %v385
        %v404 = vadd.f32 %v399, %v402
        %v405 = vadd.f32 %v400, %v403
        %v406 = vstv %s391
        %v407 = vmul.f32 %v406, %v386
        %v408 = vmul.f32 %v406, %v387
        %v409 = vadd.f32 %v404, %v407
        %v410 = vadd.f32 %v405, %v408
        %v411 = vstv %s392
        %v412 = vadd.f32 %v409, %v411
        %v413 = vadd.f32 %v410, %v411
        %v414 = vmax.f32 %v412, 0.0
        %v415 = vmax.f32 %v413, 0.0
        %v416 = vadd.f32 %v414, 0.0
        %v417 = vadd.f32 %v415, 0.0
        %s418 = sld [smem:[#allocation9 + $0x1]]
        %s419 = sld [smem:[#allocation9 + $0x21]]
        %s420 = sld [smem:[#allocation9 + $0x41]]
        %s421 = sld [smem:[#allocation9 + $0x61]]
        %s422 = sld [smem:[#allocation10 + $0x1]]
        %v423 = vstv %s418
        %v424 = vmul.f32 %v423, %v378
        %v425 = vmul.f32 %v423, %v379
        %v426 = vstv %s419
        %v427 = vmul.f32 %v426, %v380
        %v428 = vmul.f32 %v426, %v381
        %v429 = vadd.f32 %v424, %v427
        %v430 = vadd.f32 %v425, %v428
        %v431 = vstv %s420
        %v432 = vmul.f32 %v431, %v384
        %v433 = vmul.f32 %v431, %v385
        %v434 = vadd.f32 %v429, %v432
        %v435 = vadd.f32 %v430, %v433
        %v436 = vstv %s421
        %v437 = vmul.f32 %v436, %v386
        %v438 = vmul.f32 %v436, %v387
        %v439 = vadd.f32 %v434, %v437
        %v440 = vadd.f32 %v435, %v438
        %v441 = vstv %s422
        %v442 = vadd.f32 %v439, %v441
        %v443 = vadd.f32 %v440, %v441
        %v444 = vmax.f32 %v442, 0.0
        %v445 = vmax.f32 %v443, 0.0
        %v446 = vsub.f32 %v416, %v444
        %v447 = vsub.f32 %v417, %v445
        %s448 = sld [smem:[#allocation9 + $0x2]]
        %s449 = sld [smem:[#allocation9 + $0x22]]
        %s450 = sld [smem:[#allocation9 + $0x42]]
        %s451 = sld [smem:[#allocation9 + $0x62]]
        %s452 = sld [smem:[#allocation10 + $0x2]]
        %v453 = vstv %s448
        %v454 = vmul.f32 %v453, %v378
        %v455 = vmul.f32 %v453, %v379
        %v456 = vstv %s449
        %v457 = vmul.f32 %v456, %v380
        %v458 = vmul.f32 %v456, %v381
        %v459 = vadd.f32 %v454, %v457
        %v460 = vadd.f32 %v455, %v458
        %v461 = vstv %s450
        %v462 = vmul.f32 %v461, %v384
        %v463 = vmul.f32 %v461, %v385
        %v464 = vadd.f32 %v459, %v462
        %v465 = vadd.f32 %v460, %v463
        %v466 = vstv %s451
        %v467 = vmul.f32 %v466, %v386
        %v468 = vmul.f32 %v466, %v387
        %v469 = vadd.f32 %v464, %v467
        %v470 = vadd.f32 %v465, %v468
        %v471 = vstv %s452
        %v472 = vadd.f32 %v469, %v471
        %v473 = vadd.f32 %v470, %v471
        %v474 = vmax.f32 %v472, 0.0
        %v475 = vmax.f32 %v473, 0.0
        %v476 = vsub.f32 %v446, %v474
        %v477 = vsub.f32 %v447, %v475
        %s478 = sld [smem:[#allocation9 + $0x3]]
        %s479 = sld [smem:[#allocation9 + $0x23]]
        %s480 = sld [smem:[#allocation9 + $0x43]]
        %s481 = sld [smem:[#allocation9 + $0x63]]
        %s482 = sld [smem:[#allocation10 + $0x3]]
        %v483 = vstv %s478
        %v484 = vmul.f32 %v483, %v378
        %v485 = vmul.f32 %v483, %v379
        %v486 = vstv %s479
        %v487 = vmul.f32 %v486, %v380
        %v488 = vmul.f32 %v486, %v381
        %v489 = vadd.f32 %v484, %v487
        %v490 = vadd.f32 %v485, %v488
        %v491 = vstv %s480
        %v492 = vmul.f32 %v491, %v384
        %v493 = vmul.f32 %v491, %v385
        %v494 = vadd.f32 %v489, %v492
        %v495 = vadd.f32 %v490, %v493
        %v496 = vstv %s481
        %v497 = vmul.f32 %v496, %v386
        %v498 = vmul.f32 %v496, %v387
        %v499 = vadd.f32 %v494, %v497
        %v500 = vadd.f32 %v495, %v498
        %v501 = vstv %s482
        %v502 = vadd.f32 %v499, %v501
        %v503 = vadd.f32 %v500, %v501
        %v504 = vmax.f32 %v502, 0.0
        %v505 = vmax.f32 %v503, 0.0
        %v506 = vsub.f32 %v476, %v504
        %v507 = vsub.f32 %v477, %v505
        %s508 = sld [smem:[#allocation9 + $0x4]]
        %s509 = sld [smem:[#allocation9 + $0x24]]
        %s510 = sld [smem:[#allocation9 + $0x44]]
        %s511 = sld [smem:[#allocation9 + $0x64]]
        %s512 = sld [smem:[#allocation10 + $0x4]]
        %v513 = vstv %s508
        %v514 = vmul.f32 %v513, %v378
        %v515 = vmul.f32 %v513, %v379
        %v516 = vstv %s509
        %v517 = vmul.f32 %v516, %v380
        %v518 = vmul.f32 %v516, %v381
        %v519 = vadd.f32 %v514, %v517
        %v520 = vadd.f32 %v515, %v518
        %v521 = vstv %s510
        %v522 = vmul.f32 %v521, %v384
        %v523 = vmul.f32 %v521, %v385
        %v524 = vadd.f32 %v519, %v522
        %v525 = vadd.f32 %v520, %v523
        %v526 = vstv %s511
        %v527 = vmul.f32 %v526, %v386
        %v528 = vmul.f32 %v526, %v387
        %v529 = vadd.f32 %v524, %v527
        %v530 = vadd.f32 %v525, %v528
        %v531 = vstv %s512
        %v532 = vadd.f32 %v529, %v531
        %v533 = vadd.f32 %v530, %v531
        %v534 = vmax.f32 %v532, 0.0
        %v535 = vmax.f32 %v533, 0.0
        %v536 = vsub.f32 %v506, %v534
        %v537 = vsub.f32 %v507, %v535
        %s538 = sld [smem:[#allocation9 + $0x5]]
        %s539 = sld [smem:[#allocation9 + $0x25]]
        %s540 = sld [smem:[#allocation9 + $0x45]]
        %s541 = sld [smem:[#allocation9 + $0x65]]
        %s542 = sld [smem:[#allocation10 + $0x5]]
        %v543 = vstv %s538
        %v544 = vmul.f32 %v543, %v378
        %v545 = vmul.f32 %v543, %v379
        %v546 = vstv %s539
        %v547 = vmul.f32 %v546, %v380
        %v548 = vmul.f32 %v546, %v381
        %v549 = vadd.f32 %v544, %v547
        %v550 = vadd.f32 %v545, %v548
        %v551 = vstv %s540
        %v552 = vmul.f32 %v551, %v384
        %v553 = vmul.f32 %v551, %v385
        %v554 = vadd.f32 %v549, %v552
        %v555 = vadd.f32 %v550, %v553
        %v556 = vstv %s541
        %v557 = vmul.f32 %v556, %v386
        %v558 = vmul.f32 %v556, %v387
        %v559 = vadd.f32 %v554, %v557
        %v560 = vadd.f32 %v555, %v558
        %v561 = vstv %s542
        %v562 = vadd.f32 %v559, %v561
        %v563 = vadd.f32 %v560, %v561
        %v564 = vmax.f32 %v562, 0.0
        %v565 = vmax.f32 %v563, 0.0
        %v566 = vadd.f32 %v536, %v564
        %v567 = vadd.f32 %v537, %v565
        %s568 = sld [smem:[#allocation9 + $0x6]]
        %s569 = sld [smem:[#allocation9 + $0x26]]
        %s570 = sld [smem:[#allocation9 + $0x46]]
        %s571 = sld [smem:[#allocation9 + $0x66]]
        %s572 = sld [smem:[#allocation10 + $0x6]]
        %v573 = vstv %s568
        %v574 = vmul.f32 %v573, %v378
        %v575 = vmul.f32 %v573, %v379
        %v576 = vstv %s569
        %v577 = vmul.f32 %v576, %v380
        %v578 = vmul.f32 %v576, %v381
        %v579 = vadd.f32 %v574, %v577
        %v580 = vadd.f32 %v575, %v578
        %v581 = vstv %s570
        %v582 = vmul.f32 %v581, %v384
        %v583 = vmul.f32 %v581, %v385
        %v584 = vadd.f32 %v579, %v582
        %v585 = vadd.f32 %v580, %v583
        %v586 = vstv %s571
        %v587 = vmul.f32 %v586, %v386
        %v588 = vmul.f32 %v586, %v387
        %v589 = vadd.f32 %v584, %v587
        %v590 = vadd.f32 %v585, %v588
        %v591 = vstv %s572
        %v592 = vadd.f32 %v589, %v591
        %v593 = vadd.f32 %v590, %v591
        %v594 = vmax.f32 %v592, 0.0
        %v595 = vmax.f32 %v593, 0.0
        %v596 = vsub.f32 %v566, %v594
        %v597 = vsub.f32 %v567, %v595
        %s598 = sld [smem:[#allocation9 + $0x7]]
        %s599 = sld [smem:[#allocation9 + $0x27]]
        %s600 = sld [smem:[#allocation9 + $0x47]]
        %s601 = sld [smem:[#allocation9 + $0x67]]
        %s602 = sld [smem:[#allocation10 + $0x7]]
        %v603 = vstv %s598
        %v604 = vmul.f32 %v603, %v378
        %v605 = vmul.f32 %v603, %v379
        %v606 = vstv %s599
        %v607 = vmul.f32 %v606, %v380
        %v608 = vmul.f32 %v606, %v381
        %v609 = vadd.f32 %v604, %v607
        %v610 = vadd.f32 %v605, %v608
        %v611 = vstv %s600
        %v612 = vmul.f32 %v611, %v384
        %v613 = vmul.f32 %v611, %v385
        %v614 = vadd.f32 %v609, %v612
        %v615 = vadd.f32 %v610, %v613
        %v616 = vstv %s601
        %v617 = vmul.f32 %v616, %v386
        %v618 = vmul.f32 %v616, %v387
        %v619 = vadd.f32 %v614, %v617
        %v620 = vadd.f32 %v615, %v618
        %v621 = vstv %s602
        %v622 = vadd.f32 %v619, %v621
        %v623 = vadd.f32 %v620, %v621
        %v624 = vmax.f32 %v622, 0.0
        %v625 = vmax.f32 %v623, 0.0
        %v626 = vadd.f32 %v596, %v624
        %v627 = vadd.f32 %v597, %v625
        %s628 = sld [smem:[#allocation9 + $0x8]]
        %s629 = sld [smem:[#allocation9 + $0x28]]
        %s630 = sld [smem:[#allocation9 + $0x48]]
        %s631 = sld [smem:[#allocation9 + $0x68]]
        %s632 = sld [smem:[#allocation10 + $0x8]]
        %v633 = vstv %s628
        %v634 = vmul.f32 %v633, %v378
        %v635 = vmul.f32 %v633, %v379
        %v636 = vstv %s629
        %v637 = vmul.f32 %v636, %v380
        %v638 = vmul.f32 %v636, %v381
        %v639 = vadd.f32 %v634, %v637
        %v640 = vadd.f32 %v635, %v638
        %v641 = vstv %s630
        %v642 = vmul.f32 %v641, %v384
        %v643 = vmul.f32 %v641, %v385
        %v644 = vadd.f32 %v639, %v642
        %v645 = vadd.f32 %v640, %v643
        %v646 = vstv %s631
        %v647 = vmul.f32 %v646, %v386
        %v648 = vmul.f32 %v646, %v387
        %v649 = vadd.f32 %v644, %v647
        %v650 = vadd.f32 %v645, %v648
        %v651 = vstv %s632
        %v652 = vadd.f32 %v649, %v651
        %v653 = vadd.f32 %v650, %v651
        %v654 = vmax.f32 %v652, 0.0
        %v655 = vmax.f32 %v653, 0.0
        %v656 = vsub.f32 %v626, %v654
        %v657 = vsub.f32 %v627, %v655
        %s658 = sld [smem:[#allocation9 + $0x9]]
        %s659 = sld [smem:[#allocation9 + $0x29]]
        %s660 = sld [smem:[#allocation9 + $0x49]]
        %s661 = sld [smem:[#allocation9 + $0x69]]
        %s662 = sld [smem:[#allocation10 + $0x9]]
        %v663 = vstv %s658
        %v664 = vmul.f32 %v663, %v378
        %v665 = vmul.f32 %v663, %v379
        %v666 = vstv %s659
        %v667 = vmul.f32 %v666, %v380
        %v668 = vmul.f32 %v666, %v381
        %v669 = vadd.f32 %v664, %v667
        %v670 = vadd.f32 %v665, %v668
        %v671 = vstv %s660
        %v672 = vmul.f32 %v671, %v384
        %v673 = vmul.f32 %v671, %v385
        %v674 = vadd.f32 %v669, %v672
        %v675 = vadd.f32 %v670, %v673
        %v676 = vstv %s661
        %v677 = vmul.f32 %v676, %v386
        %v678 = vmul.f32 %v676, %v387
        %v679 = vadd.f32 %v674, %v677
        %v680 = vadd.f32 %v675, %v678
        %v681 = vstv %s662
        %v682 = vadd.f32 %v679, %v681
        %v683 = vadd.f32 %v680, %v681
        %v684 = vmax.f32 %v682, 0.0
        %v685 = vmax.f32 %v683, 0.0
        %v686 = vadd.f32 %v656, %v684
        %v687 = vadd.f32 %v657, %v685
        %s688 = sld [smem:[#allocation9 + $0xa]]
        %s689 = sld [smem:[#allocation9 + $0x2a]]
        %s690 = sld [smem:[#allocation9 + $0x4a]]
        %s691 = sld [smem:[#allocation9 + $0x6a]]
        %s692 = sld [smem:[#allocation10 + $0xa]]
        %v693 = vstv %s688
        %v694 = vmul.f32 %v693, %v378
        %v695 = vmul.f32 %v693, %v379
        %v696 = vstv %s689
        %v697 = vmul.f32 %v696, %v380
        %v698 = vmul.f32 %v696, %v381
        %v699 = vadd.f32 %v694, %v697
        %v700 = vadd.f32 %v695, %v698
        %v701 = vstv %s690
        %v702 = vmul.f32 %v701, %v384
        %v703 = vmul.f32 %v701, %v385
        %v704 = vadd.f32 %v699, %v702
        %v705 = vadd.f32 %v700, %v703
        %v706 = vstv %s691
        %v707 = vmul.f32 %v706, %v386
        %v708 = vmul.f32 %v706, %v387
        %v709 = vadd.f32 %v704, %v707
        %v710 = vadd.f32 %v705, %v708
        %v711 = vstv %s692
        %v712 = vadd.f32 %v709, %v711
        %v713 = vadd.f32 %v710, %v711
        %v714 = vmax.f32 %v712, 0.0
        %v715 = vmax.f32 %v713, 0.0
        %v716 = vadd.f32 %v686, %v714
        %v717 = vadd.f32 %v687, %v715
        %s718 = sld [smem:[#allocation9 + $0xb]]
        %s719 = sld [smem:[#allocation9 + $0x2b]]
        %s720 = sld [smem:[#allocation9 + $0x4b]]
        %s721 = sld [smem:[#allocation9 + $0x6b]]
        %s722 = sld [smem:[#allocation10 + $0xb]]
        %v723 = vstv %s718
        %v724 = vmul.f32 %v723, %v378
        %v725 = vmul.f32 %v723, %v379
        %v726 = vstv %s719
        %v727 = vmul.f32 %v726, %v380
        %v728 = vmul.f32 %v726, %v381
        %v729 = vadd.f32 %v724, %v727
        %v730 = vadd.f32 %v725, %v728
        %v731 = vstv %s720
        %v732 = vmul.f32 %v731, %v384
        %v733 = vmul.f32 %v731, %v385
        %v734 = vadd.f32 %v729, %v732
        %v735 = vadd.f32 %v730, %v733
        %v736 = vstv %s721
        %v737 = vmul.f32 %v736, %v386
        %v738 = vmul.f32 %v736, %v387
        %v739 = vadd.f32 %v734, %v737
        %v740 = vadd.f32 %v735, %v738
        %v741 = vstv %s722
        %v742 = vadd.f32 %v739, %v741
        %v743 = vadd.f32 %v740, %v741
        %v744 = vmax.f32 %v742, 0.0
        %v745 = vmax.f32 %v743, 0.0
        %v746 = vadd.f32 %v716, %v744
        %v747 = vadd.f32 %v717, %v745
        %s748 = sld [smem:[#allocation9 + $0xc]]
        %s749 = sld [smem:[#allocation9 + $0x2c]]
        %s750 = sld [smem:[#allocation9 + $0x4c]]
        %s751 = sld [smem:[#allocation9 + $0x6c]]
        %s752 = sld [smem:[#allocation10 + $0xc]]
        %v753 = vstv %s748
        %v754 = vmul.f32 %v753, %v378
        %v755 = vmul.f32 %v753, %v379
        %v756 = vstv %s749
        %v757 = vmul.f32 %v756, %v380
        %v758 = vmul.f32 %v756, %v381
        %v759 = vadd.f32 %v754, %v757
        %v760 = vadd.f32 %v755, %v758
        %v761 = vstv %s750
        %v762 = vmul.f32 %v761, %v384
        %v763 = vmul.f32 %v761, %v385
        %v764 = vadd.f32 %v759, %v762
        %v765 = vadd.f32 %v760, %v763
        %v766 = vstv %s751
        %v767 = vmul.f32 %v766, %v386
        %v768 = vmul.f32 %v766, %v387
        %v769 = vadd.f32 %v764, %v767
        %v770 = vadd.f32 %v765, %v768
        %v771 = vstv %s752
        %v772 = vadd.f32 %v769, %v771
        %v773 = vadd.f32 %v770, %v771
        %v774 = vmax.f32 %v772, 0.0
        %v775 = vmax.f32 %v773, 0.0
        %v776 = vsub.f32 %v746, %v774
        %v777 = vsub.f32 %v747, %v775
        %s778 = sld [smem:[#allocation9 + $0xd]]
        %s779 = sld [smem:[#allocation9 + $0x2d]]
        %s780 = sld [smem:[#allocation9 + $0x4d]]
        %s781 = sld [smem:[#allocation9 + $0x6d]]
        %s782 = sld [smem:[#allocation10 + $0xd]]
        %v783 = vstv %s778
        %v784 = vmul.f32 %v783, %v378
        %v785 = vmul.f32 %v783, %v379
        %v786 = vstv %s779
        %v787 = vmul.f32 %v786, %v380
        %v788 = vmul.f32 %v786, %v381
        %v789 = vadd.f32 %v784, %v787
        %v790 = vadd.f32 %v785, %v788
        %v791 = vstv %s780
        %v792 = vmul.f32 %v791, %v384
        %v793 = vmul.f32 %v791, %v385
        %v794 = vadd.f32 %v789, %v792
        %v795 = vadd.f32 %v790, %v793
        %v796 = vstv %s781
        %v797 = vmul.f32 %v796, %v386
        %v798 = vmul.f32 %v796, %v387
        %v799 = vadd.f32 %v794, %v797
        %v800 = vadd.f32 %v795, %v798
        %v801 = vstv %s782
        %v802 = vadd.f32 %v799, %v801
        %v803 = vadd.f32 %v800, %v801
        %v804 = vmax.f32 %v802, 0.0
        %v805 = vmax.f32 %v803, 0.0
        %v806 = vadd.f32 %v776, %v804
        %v807 = vadd.f32 %v777, %v805
        %s808 = sld [smem:[#allocation9 + $0xe]]
        %s809 = sld [smem:[#allocation9 + $0x2e]]
        %s810 = sld [smem:[#allocation9 + $0x4e]]
        %s811 = sld [smem:[#allocation9 + $0x6e]]
        %s812 = sld [smem:[#allocation10 + $0xe]]
        %v813 = vstv %s808
        %v814 = vmul.f32 %v813, %v378
        %v815 = vmul.f32 %v813, %v379
        %v816 = vstv %s809
        %v817 = vmul.f32 %v816, %v380
        %v818 = vmul.f32 %v816, %v381
        %v819 = vadd.f32 %v814, %v817
        %v820 = vadd.f32 %v815, %v818
        %v821 = vstv %s810
        %v822 = vmul.f32 %v821, %v384
        %v823 = vmul.f32 %v821, %v385
        %v824 = vadd.f32 %v819, %v822
        %v825 = vadd.f32 %v820, %v823
        %v826 = vstv %s811
        %v827 = vmul.f32 %v826, %v386
        %v828 = vmul.f32 %v826, %v387
        %v829 = vadd.f32 %v824, %v827
        %v830 = vadd.f32 %v825, %v828
        %v831 = vstv %s812
        %v832 = vadd.f32 %v829, %v831
        %v833 = vadd.f32 %v830, %v831
        %v834 = vmax.f32 %v832, 0.0
        %v835 = vmax.f32 %v833, 0.0
        %v836 = vadd.f32 %v806, %v834
        %v837 = vadd.f32 %v807, %v835
        %s838 = sld [smem:[#allocation9 + $0xf]]
        %s839 = sld [smem:[#allocation9 + $0x2f]]
        %s840 = sld [smem:[#allocation9 + $0x4f]]
        %s841 = sld [smem:[#allocation9 + $0x6f]]
        %s842 = sld [smem:[#allocation10 + $0xf]]
        %v843 = vstv %s838
        %v844 = vmul.f32 %v843, %v378
        %v845 = vmul.f32 %v843, %v379
        %v846 = vstv %s839
        %v847 = vmul.f32 %v846, %v380
        %v848 = vmul.f32 %v846, %v381
        %v849 = vadd.f32 %v844, %v847
        %v850 = vadd.f32 %v845, %v848
        %v851 = vstv %s840
        %v852 = vmul.f32 %v851, %v384
        %v853 = vmul.f32 %v851, %v385
        %v854 = vadd.f32 %v849, %v852
        %v855 = vadd.f32 %v850, %v853
        %v856 = vstv %s841
        %v857 = vmul.f32 %v856, %v386
        %v858 = vmul.f32 %v856, %v387
        %v859 = vadd.f32 %v854, %v857
        %v860 = vadd.f32 %v855, %v858
        %v861 = vstv %s842
        %v862 = vadd.f32 %v859, %v861
        %v863 = vadd.f32 %v860, %v861
        %v864 = vmax.f32 %v862, 0.0
        %v865 = vmax.f32 %v863, 0.0
        %v866 = vsub.f32 %v836, %v864
        %v867 = vsub.f32 %v837, %v865
        %s868 = sld [smem:[#allocation9 + $0x10]]
        %s869 = sld [smem:[#allocation9 + $0x30]]
        %s870 = sld [smem:[#allocation9 + $0x50]]
        %s871 = sld [smem:[#allocation9 + $0x70]]
        %s872 = sld [smem:[#allocation10 + $0x10]]
        %v873 = vstv %s868
        %v874 = vmul.f32 %v873, %v378
        %v875 = vmul.f32 %v873, %v379
        %v876 = vstv %s869
        %v877 = vmul.f32 %v876, %v380
        %v878 = vmul.f32 %v876, %v381
        %v879 = vadd.f32 %v874, %v877
        %v880 = vadd.f32 %v875, %v878
        %v881 = vstv %s870
        %v882 = vmul.f32 %v881, %v384
        %v883 = vmul.f32 %v881, %v385
        %v884 = vadd.f32 %v879, %v882
        %v885 = vadd.f32 %v880, %v883
        %v886 = vstv %s871
        %v887 = vmul.f32 %v886, %v386
        %v888 = vmul.f32 %v886, %v387
        %v889 = vadd.f32 %v884, %v887
        %v890 = vadd.f32 %v885, %v888
        %v891 = vstv %s872
        %v892 = vadd.f32 %v889, %v891
        %v893 = vadd.f32 %v890, %v891
        %v894 = vmax.f32 %v892, 0.0
        %v895 = vmax.f32 %v893, 0.0
        %v896 = vsub.f32 %v866, %v894
        %v897 = vsub.f32 %v867, %v895
        %s898 = sld [smem:[#allocation9 + $0x11]]
        %s899 = sld [smem:[#allocation9 + $0x31]]
        %s900 = sld [smem:[#allocation9 + $0x51]]
        %s901 = sld [smem:[#allocation9 + $0x71]]
        %s902 = sld [smem:[#allocation10 + $0x11]]
        %v903 = vstv %s898
        %v904 = vmul.f32 %v903, %v378
        %v905 = vmul.f32 %v903, %v379
        %v906 = vstv %s899
        %v907 = vmul.f32 %v906, %v380
        %v908 = vmul.f32 %v906, %v381
        %v909 = vadd.f32 %v904, %v907
        %v910 = vadd.f32 %v905, %v908
        %v911 = vstv %s900
        %v912 = vmul.f32 %v911, %v384
        %v913 = vmul.f32 %v911, %v385
        %v914 = vadd.f32 %v909, %v912
        %v915 = vadd.f32 %v910, %v913
        %v916 = vstv %s901
        %v917 = vmul.f32 %v916, %v386
        %v918 = vmul.f32 %v916, %v387
        %v919 = vadd.f32 %v914, %v917
        %v920 = vadd.f32 %v915, %v918
        %v921 = vstv %s902
        %v922 = vadd.f32 %v919, %v921
        %v923 = vadd.f32 %v920, %v921
        %v924 = vmax.f32 %v922, 0.0
        %v925 = vmax.f32 %v923, 0.0
        %v926 = vsub.f32 %v896, %v924
        %v927 = vsub.f32 %v897, %v925
        %s928 = sld [smem:[#allocation9 + $0x12]]
        %s929 = sld [smem:[#allocation9 + $0x32]]
        %s930 = sld [smem:[#allocation9 + $0x52]]
        %s931 = sld [smem:[#allocation9 + $0x72]]
        %s932 = sld [smem:[#allocation10 + $0x12]]
        %v933 = vstv %s928
        %v934 = vmul.f32 %v933, %v378
        %v935 = vmul.f32 %v933, %v379
        %v936 = vstv %s929
        %v937 = vmul.f32 %v936, %v380
        %v938 = vmul.f32 %v936, %v381
        %v939 = vadd.f32 %v934, %v937
        %v940 = vadd.f32 %v935, %v938
        %v941 = vstv %s930
        %v942 = vmul.f32 %v941, %v384
        %v943 = vmul.f32 %v941, %v385
        %v944 = vadd.f32 %v939, %v942
        %v945 = vadd.f32 %v940, %v943
        %v946 = vstv %s931
        %v947 = vmul.f32 %v946, %v386
        %v948 = vmul.f32 %v946, %v387
        %v949 = vadd.f32 %v944, %v947
        %v950 = vadd.f32 %v945, %v948
        %v951 = vstv %s932
        %v952 = vadd.f32 %v949, %v951
        %v953 = vadd.f32 %v950, %v951
        %v954 = vmax.f32 %v952, 0.0
        %v955 = vmax.f32 %v953, 0.0
        %v956 = vadd.f32 %v926, %v954
        %v957 = vadd.f32 %v927, %v955
        %s958 = sld [smem:[#allocation9 + $0x13]]
        %s959 = sld [smem:[#allocation9 + $0x33]]
        %s960 = sld [smem:[#allocation9 + $0x53]]
        %s961 = sld [smem:[#allocation9 + $0x73]]
        %s962 = sld [smem:[#allocation10 + $0x13]]
        %v963 = vstv %s958
        %v964 = vmul.f32 %v963, %v378
        %v965 = vmul.f32 %v963, %v379
        %v966 = vstv %s959
        %v967 = vmul.f32 %v966, %v380
        %v968 = vmul.f32 %v966, %v381
        %v969 = vadd.f32 %v964, %v967
        %v970 = vadd.f32 %v965, %v968
        %v971 = vstv %s960
        %v972 = vmul.f32 %v971, %v384
        %v973 = vmul.f32 %v971, %v385
        %v974 = vadd.f32 %v969, %v972
        %v975 = vadd.f32 %v970, %v973
        %v976 = vstv %s961
        %v977 = vmul.f32 %v976, %v386
        %v978 = vmul.f32 %v976, %v387
        %v979 = vadd.f32 %v974, %v977
        %v980 = vadd.f32 %v975, %v978
        %v981 = vstv %s962
        %v982 = vadd.f32 %v979, %v981
        %v983 = vadd.f32 %v980, %v981
        %v984 = vmax.f32 %v982, 0.0
        %v985 = vmax.f32 %v983, 0.0
        %v986 = vadd.f32 %v956, %v984
        %v987 = vadd.f32 %v957, %v985
        %s988 = sld [smem:[#allocation9 + $0x14]]
        %s989 = sld [smem:[#allocation9 + $0x34]]
        %s990 = sld [smem:[#allocation9 + $0x54]]
        %s991 = sld [smem:[#allocation9 + $0x74]]
        %s992 = sld [smem:[#allocation10 + $0x14]]
        %v993 = vstv %s988
        %v994 = vmul.f32 %v993, %v378
        %v995 = vmul.f32 %v993, %v379
        %v996 = vstv %s989
        %v997 = vmul.f32 %v996, %v380
        %v998 = vmul.f32 %v996, %v381
        %v999 = vadd.f32 %v994, %v997
        %v1000 = vadd.f32 %v995, %v998
        %v1001 = vstv %s990
        %v1002 = vmul.f32 %v1001, %v384
        %v1003 = vmul.f32 %v1001, %v385
        %v1004 = vadd.f32 %v999, %v1002
        %v1005 = vadd.f32 %v1000, %v1003
        %v1006 = vstv %s991
        %v1007 = vmul.f32 %v1006, %v386
        %v1008 = vmul.f32 %v1006, %v387
        %v1009 = vadd.f32 %v1004, %v1007
        %v1010 = vadd.f32 %v1005, %v1008
        %v1011 = vstv %s992
        %v1012 = vadd.f32 %v1009, %v1011
        %v1013 = vadd.f32 %v1010, %v1011
        %v1014 = vmax.f32 %v1012, 0.0
        %v1015 = vmax.f32 %v1013, 0.0
        %v1016 = vadd.f32 %v986, %v1014
        %v1017 = vadd.f32 %v987, %v1015
        %s1018 = sld [smem:[#allocation9 + $0x15]]
        %s1019 = sld [smem:[#allocation9 + $0x35]]
        %s1020 = sld [smem:[#allocation9 + $0x55]]
        %s1021 = sld [smem:[#allocation9 + $0x75]]
        %s1022 = sld [smem:[#allocation10 + $0x15]]
        %v1023 = vstv %s1018
        %v1024 = vmul.f32 %v1023, %v378
        %v1025 = vmul.f32 %v1023, %v379
        %v1026 = vstv %s1019
        %v1027 = vmul.f32 %v1026, %v380
        %v1028 = vmul.f32 %v1026, %v381
        %v1029 = vadd.f32 %v1024, %v1027
        %v1030 = vadd.f32 %v1025, %v1028
        %v1031 = vstv %s1020
        %v1032 = vmul.f32 %v1031, %v384
        %v1033 = vmul.f32 %v1031, %v385
        %v1034 = vadd.f32 %v1029, %v1032
        %v1035 = vadd.f32 %v1030, %v1033
        %v1036 = vstv %s1021
        %v1037 = vmul.f32 %v1036, %v386
        %v1038 = vmul.f32 %v1036, %v387
        %v1039 = vadd.f32 %v1034, %v1037
        %v1040 = vadd.f32 %v1035, %v1038
        %v1041 = vstv %s1022
        %v1042 = vadd.f32 %v1039, %v1041
        %v1043 = vadd.f32 %v1040, %v1041
        %v1044 = vmax.f32 %v1042, 0.0
        %v1045 = vmax.f32 %v1043, 0.0
        %v1046 = vadd.f32 %v1016, %v1044
        %v1047 = vadd.f32 %v1017, %v1045
        %s1048 = sld [smem:[#allocation9 + $0x16]]
        %s1049 = sld [smem:[#allocation9 + $0x36]]
        %s1050 = sld [smem:[#allocation9 + $0x56]]
        %s1051 = sld [smem:[#allocation9 + $0x76]]
        %s1052 = sld [smem:[#allocation10 + $0x16]]
        %v1053 = vstv %s1048
        %v1054 = vmul.f32 %v1053, %v378
        %v1055 = vmul.f32 %v1053, %v379
        %v1056 = vstv %s1049
        %v1057 = vmul.f32 %v1056, %v380
        %v1058 = vmul.f32 %v1056, %v381
        %v1059 = vadd.f32 %v1054, %v1057
        %v1060 = vadd.f32 %v1055, %v1058
        %v1061 = vstv %s1050
        %v1062 = vmul.f32 %v1061, %v384
        %v1063 = vmul.f32 %v1061, %v385
        %v1064 = vadd.f32 %v1059, %v1062
        %v1065 = vadd.f32 %v1060, %v1063
        %v1066 = vstv %s1051
        %v1067 = vmul.f32 %v1066, %v386
        %v1068 = vmul.f32 %v1066, %v387
        %v1069 = vadd.f32 %v1064, %v1067
        %v1070 = vadd.f32 %v1065, %v1068
        %v1071 = vstv %s1052
        %v1072 = vadd.f32 %v1069, %v1071
        %v1073 = vadd.f32 %v1070, %v1071
        %v1074 = vmax.f32 %v1072, 0.0
        %v1075 = vmax.f32 %v1073, 0.0
        %v1076 = vsub.f32 %v1046, %v1074
        %v1077 = vsub.f32 %v1047, %v1075
        %s1078 = sld [smem:[#allocation9 + $0x17]]
        %s1079 = sld [smem:[#allocation9 + $0x37]]
        %s1080 = sld [smem:[#allocation9 + $0x57]]
        %s1081 = sld [smem:[#allocation9 + $0x77]]
        %s1082 = sld [smem:[#allocation10 + $0x17]]
        %v1083 = vstv %s1078
        %v1084 = vmul.f32 %v1083, %v378
        %v1085 = vmul.f32 %v1083, %v379
        %v1086 = vstv %s1079
        %v1087 = vmul.f32 %v1086, %v380
        %v1088 = vmul.f32 %v1086, %v381
        %v1089 = vadd.f32 %v1084, %v1087
        %v1090 = vadd.f32 %v1085, %v1088
        %v1091 = vstv %s1080
        %v1092 = vmul.f32 %v1091, %v384
        %v1093 = vmul.f32 %v1091, %v385
        %v1094 = vadd.f32 %v1089, %v1092
        %v1095 = vadd.f32 %v1090, %v1093
        %v1096 = vstv %s1081
        %v1097 = vmul.f32 %v1096, %v386
        %v1098 = vmul.f32 %v1096, %v387
        %v1099 = vadd.f32 %v1094, %v1097
        %v1100 = vadd.f32 %v1095, %v1098
        %v1101 = vstv %s1082
        %v1102 = vadd.f32 %v1099, %v1101
        %v1103 = vadd.f32 %v1100, %v1101
        %v1104 = vmax.f32 %v1102, 0.0
        %v1105 = vmax.f32 %v1103, 0.0
        %v1106 = vsub.f32 %v1076, %v1104
        %v1107 = vsub.f32 %v1077, %v1105
        %s1108 = sld [smem:[#allocation9 + $0x18]]
        %s1109 = sld [smem:[#allocation9 + $0x38]]
        %s1110 = sld [smem:[#allocation9 + $0x58]]
        %s1111 = sld [smem:[#allocation9 + $0x78]]
        %s1112 = sld [smem:[#allocation10 + $0x18]]
        %v1113 = vstv %s1108
        %v1114 = vmul.f32 %v1113, %v378
        %v1115 = vmul.f32 %v1113, %v379
        %v1116 = vstv %s1109
        %v1117 = vmul.f32 %v1116, %v380
        %v1118 = vmul.f32 %v1116, %v381
        %v1119 = vadd.f32 %v1114, %v1117
        %v1120 = vadd.f32 %v1115, %v1118
        %v1121 = vstv %s1110
        %v1122 = vmul.f32 %v1121, %v384
        %v1123 = vmul.f32 %v1121, %v385
        %v1124 = vadd.f32 %v1119, %v1122
        %v1125 = vadd.f32 %v1120, %v1123
        %v1126 = vstv %s1111
        %v1127 = vmul.f32 %v1126, %v386
        %v1128 = vmul.f32 %v1126, %v387
        %v1129 = vadd.f32 %v1124, %v1127
        %v1130 = vadd.f32 %v1125, %v1128
        %v1131 = vstv %s1112
        %v1132 = vadd.f32 %v1129, %v1131
        %v1133 = vadd.f32 %v1130, %v1131
        %v1134 = vmax.f32 %v1132, 0.0
        %v1135 = vmax.f32 %v1133, 0.0
        %v1136 = vsub.f32 %v1106, %v1134
        %v1137 = vsub.f32 %v1107, %v1135
        %s1138 = sld [smem:[#allocation9 + $0x19]]
        %s1139 = sld [smem:[#allocation9 + $0x39]]
        %s1140 = sld [smem:[#allocation9 + $0x59]]
        %s1141 = sld [smem:[#allocation9 + $0x79]]
        %s1142 = sld [smem:[#allocation10 + $0x19]]
        %v1143 = vstv %s1138
        %v1144 = vmul.f32 %v1143, %v378
        %v1145 = vmul.f32 %v1143, %v379
        %v1146 = vstv %s1139
        %v1147 = vmul.f32 %v1146, %v380
        %v1148 = vmul.f32 %v1146, %v381
        %v1149 = vadd.f32 %v1144, %v1147
        %v1150 = vadd.f32 %v1145, %v1148
        %v1151 = vstv %s1140
        %v1152 = vmul.f32 %v1151, %v384
        %v1153 = vmul.f32 %v1151, %v385
        %v1154 = vadd.f32 %v1149, %v1152
        %v1155 = vadd.f32 %v1150, %v1153
        %v1156 = vstv %s1141
        %v1157 = vmul.f32 %v1156, %v386
        %v1158 = vmul.f32 %v1156, %v387
        %v1159 = vadd.f32 %v1154, %v1157
        %v1160 = vadd.f32 %v1155, %v1158
        %v1161 = vstv %s1142
        %v1162 = vadd.f32 %v1159, %v1161
        %v1163 = vadd.f32 %v1160, %v1161
        %v1164 = vmax.f32 %v1162, 0.0
        %v1165 = vmax.f32 %v1163, 0.0
        %v1166 = vsub.f32 %v1136, %v1164
        %v1167 = vsub.f32 %v1137, %v1165
        %s1168 = sld [smem:[#allocation9 + $0x1a]]
        %s1169 = sld [smem:[#allocation9 + $0x3a]]
        %s1170 = sld [smem:[#allocation9 + $0x5a]]
        %s1171 = sld [smem:[#allocation9 + $0x7a]]
        %s1172 = sld [smem:[#allocation10 + $0x1a]]
        %v1173 = vstv %s1168
        %v1174 = vmul.f32 %v1173, %v378
        %v1175 = vmul.f32 %v1173, %v379
        %v1176 = vstv %s1169
        %v1177 = vmul.f32 %v1176, %v380
        %v1178 = vmul.f32 %v1176, %v381
        %v1179 = vadd.f32 %v1174, %v1177
        %v1180 = vadd.f32 %v1175, %v1178
        %v1181 = vstv %s1170
        %v1182 = vmul.f32 %v1181, %v384
        %v1183 = vmul.f32 %v1181, %v385
        %v1184 = vadd.f32 %v1179, %v1182
        %v1185 = vadd.f32 %v1180, %v1183
        %v1186 = vstv %s1171
        %v1187 = vmul.f32 %v1186, %v386
        %v1188 = vmul.f32 %v1186, %v387
        %v1189 = vadd.f32 %v1184, %v1187
        %v1190 = vadd.f32 %v1185, %v1188
        %v1191 = vstv %s1172
        %v1192 = vadd.f32 %v1189, %v1191
        %v1193 = vadd.f32 %v1190, %v1191
        %v1194 = vmax.f32 %v1192, 0.0
        %v1195 = vmax.f32 %v1193, 0.0
        %v1196 = vsub.f32 %v1166, %v1194
        %v1197 = vsub.f32 %v1167, %v1195
        %s1198 = sld [smem:[#allocation9 + $0x1b]]
        %s1199 = sld [smem:[#allocation9 + $0x3b]]
        %s1200 = sld [smem:[#allocation9 + $0x5b]]
        %s1201 = sld [smem:[#allocation9 + $0x7b]]
        %s1202 = sld [smem:[#allocation10 + $0x1b]]
        %v1203 = vstv %s1198
        %v1204 = vmul.f32 %v1203, %v378
        %v1205 = vmul.f32 %v1203, %v379
        %v1206 = vstv %s1199
        %v1207 = vmul.f32 %v1206, %v380
        %v1208 = vmul.f32 %v1206, %v381
        %v1209 = vadd.f32 %v1204, %v1207
        %v1210 = vadd.f32 %v1205, %v1208
        %v1211 = vstv %s1200
        %v1212 = vmul.f32 %v1211, %v384
        %v1213 = vmul.f32 %v1211, %v385
        %v1214 = vadd.f32 %v1209, %v1212
        %v1215 = vadd.f32 %v1210, %v1213
        %v1216 = vstv %s1201
        %v1217 = vmul.f32 %v1216, %v386
        %v1218 = vmul.f32 %v1216, %v387
        %v1219 = vadd.f32 %v1214, %v1217
        %v1220 = vadd.f32 %v1215, %v1218
        %v1221 = vstv %s1202
        %v1222 = vadd.f32 %v1219, %v1221
        %v1223 = vadd.f32 %v1220, %v1221
        %v1224 = vmax.f32 %v1222, 0.0
        %v1225 = vmax.f32 %v1223, 0.0
        %v1226 = vsub.f32 %v1196, %v1224
        %v1227 = vsub.f32 %v1197, %v1225
        %s1228 = sld [smem:[#allocation9 + $0x1c]]
        %s1229 = sld [smem:[#allocation9 + $0x3c]]
        %s1230 = sld [smem:[#allocation9 + $0x5c]]
        %s1231 = sld [smem:[#allocation9 + $0x7c]]
        %s1232 = sld [smem:[#allocation10 + $0x1c]]
        %v1233 = vstv %s1228
        %v1234 = vmul.f32 %v1233, %v378
        %v1235 = vmul.f32 %v1233, %v379
        %v1236 = vstv %s1229
        %v1237 = vmul.f32 %v1236, %v380
        %v1238 = vmul.f32 %v1236, %v381
        %v1239 = vadd.f32 %v1234, %v1237
        %v1240 = vadd.f32 %v1235, %v1238
        %v1241 = vstv %s1230
        %v1242 = vmul.f32 %v1241, %v384
        %v1243 = vmul.f32 %v1241, %v385
        %v1244 = vadd.f32 %v1239, %v1242
        %v1245 = vadd.f32 %v1240, %v1243
        %v1246 = vstv %s1231
        %v1247 = vmul.f32 %v1246, %v386
        %v1248 = vmul.f32 %v1246, %v387
        %v1249 = vadd.f32 %v1244, %v1247
        %v1250 = vadd.f32 %v1245, %v1248
        %v1251 = vstv %s1232
        %v1252 = vadd.f32 %v1249, %v1251
        %v1253 = vadd.f32 %v1250, %v1251
        %v1254 = vmax.f32 %v1252, 0.0
        %v1255 = vmax.f32 %v1253, 0.0
        %v1256 = vsub.f32 %v1226, %v1254
        %v1257 = vsub.f32 %v1227, %v1255
        %s1258 = sld [smem:[#allocation9 + $0x1d]]
        %s1259 = sld [smem:[#allocation9 + $0x3d]]
        %s1260 = sld [smem:[#allocation9 + $0x5d]]
        %s1261 = sld [smem:[#allocation9 + $0x7d]]
        %s1262 = sld [smem:[#allocation10 + $0x1d]]
        %v1263 = vstv %s1258
        %v1264 = vmul.f32 %v1263, %v378
        %v1265 = vmul.f32 %v1263, %v379
        %v1266 = vstv %s1259
        %v1267 = vmul.f32 %v1266, %v380
        %v1268 = vmul.f32 %v1266, %v381
        %v1269 = vadd.f32 %v1264, %v1267
        %v1270 = vadd.f32 %v1265, %v1268
        %v1271 = vstv %s1260
        %v1272 = vmul.f32 %v1271, %v384
        %v1273 = vmul.f32 %v1271, %v385
        %v1274 = vadd.f32 %v1269, %v1272
        %v1275 = vadd.f32 %v1270, %v1273
        %v1276 = vstv %s1261
        %v1277 = vmul.f32 %v1276, %v386
        %v1278 = vmul.f32 %v1276, %v387
        %v1279 = vadd.f32 %v1274, %v1277
        %v1280 = vadd.f32 %v1275, %v1278
        %v1281 = vstv %s1262
        %v1282 = vadd.f32 %v1279, %v1281
        %v1283 = vadd.f32 %v1280, %v1281
        %v1284 = vmax.f32 %v1282, 0.0
        %v1285 = vmax.f32 %v1283, 0.0
        %v1286 = vsub.f32 %v1256, %v1284
        %v1287 = vsub.f32 %v1257, %v1285
        %s1288 = sld [smem:[#allocation9 + $0x1e]]
        %s1289 = sld [smem:[#allocation9 + $0x3e]]
        %s1290 = sld [smem:[#allocation9 + $0x5e]]
        %s1291 = sld [smem:[#allocation9 + $0x7e]]
        %s1292 = sld [smem:[#allocation10 + $0x1e]]
        %v1293 = vstv %s1288
        %v1294 = vmul.f32 %v1293, %v378
        %v1295 = vmul.f32 %v1293, %v379
        %v1296 = vstv %s1289
        %v1297 = vmul.f32 %v1296, %v380
        %v1298 = vmul.f32 %v1296, %v381
        %v1299 = vadd.f32 %v1294, %v1297
        %v1300 = vadd.f32 %v1295, %v1298
        %v1301 = vstv %s1290
        %v1302 = vmul.f32 %v1301, %v384
        %v1303 = vmul.f32 %v1301, %v385
        %v1304 = vadd.f32 %v1299, %v1302
        %v1305 = vadd.f32 %v1300, %v1303
        %v1306 = vstv %s1291
        %v1307 = vmul.f32 %v1306, %v386
        %v1308 = vmul.f32 %v1306, %v387
        %v1309 = vadd.f32 %v1304, %v1307
        %v1310 = vadd.f32 %v1305, %v1308
        %v1311 = vstv %s1292
        %v1312 = vadd.f32 %v1309, %v1311
        %v1313 = vadd.f32 %v1310, %v1311
        %v1314 = vmax.f32 %v1312, 0.0
        %v1315 = vmax.f32 %v1313, 0.0
        %v1316 = vadd.f32 %v1286, %v1314
        %v1317 = vadd.f32 %v1287, %v1315
        %s1318 = sld [smem:[#allocation9 + $0x1f]]
        %s1319 = sld [smem:[#allocation9 + $0x3f]]
        %s1320 = sld [smem:[#allocation9 + $0x5f]]
        %s1321 = sld [smem:[#allocation9 + $0x7f]]
        %s1322 = sld [smem:[#allocation10 + $0x1f]]
        %v1323 = vstv %s1318
        %v1324 = vmul.f32 %v1323, %v378
        %v1325 = vmul.f32 %v1323, %v379
        %v1326 = vstv %s1319
        %v1327 = vmul.f32 %v1326, %v380
        %v1328 = vmul.f32 %v1326, %v381
        %v1329 = vadd.f32 %v1324, %v1327
        %v1330 = vadd.f32 %v1325, %v1328
        %v1331 = vstv %s1320
        %v1332 = vmul.f32 %v1331, %v384
        %v1333 = vmul.f32 %v1331, %v385
        %v1334 = vadd.f32 %v1329, %v1332
        %v1335 = vadd.f32 %v1330, %v1333
        %v1336 = vstv %s1321
        %v1337 = vmul.f32 %v1336, %v386
        %v1338 = vmul.f32 %v1336, %v387
        %v1339 = vadd.f32 %v1334, %v1337
        %v1340 = vadd.f32 %v1335, %v1338
        %v1341 = vstv %s1322
        %v1342 = vadd.f32 %v1339, %v1341
        %v1343 = vadd.f32 %v1340, %v1341
        %v1344 = vmax.f32 %v1342, 0.0
        %v1345 = vmax.f32 %v1343, 0.0
        %v1346 = vsub.f32 %v1316, %v1344
        %v1347 = vsub.f32 %v1317, %v1345
        %v1348 = vstv %s367
        %v1349 = vadd.f32 %v1346, %v1348
        %v1350 = vadd.f32 %v1347, %v1348
        %v1351 = vmax.f32 %v1349, 0.0
        %v1352 = vmax.f32 %v1350, 0.0
        %v1354 = vperm.slane %v366, 0
        %v1355 = vperm.slane %v366, 1
        %v1358 = vmul.f32 %v1351, %v1354
        %v1359 = vmul.f32 %v1352, %v1355
        %v1360 = vadd.f32 %v1358, %v1359
        %1361 = vadd.xlane.f32.xlu0 %v1360
        %v1362 = vpop.xlane.xlu0 %1361
        %v1363 = vstv %s368
        %v1364 = vadd.f32 %v1362, %v1363
        %v1365 = vxor.u32 %v1364, 2147483648
        %v1366 = vmul.f32 %v1365, 1.442695
        %v1367 = vpow.pop %v1366
        %v1368 = vadd.f32 %v1367, 1.0
        %v1369 = vrcp.pop %v1368
        %v1370 = vmul.f32 %v1368, %v1369
        %v1371 = vsub.f32 1.0, %v1370
        %v1372 = vmul.f32 %v1369, %v1371
        %v1373 = vadd.f32 %v1369, %v1372
        %vm1374 = vweird.f32 %v1368
        %vm1375 = vweird.f32 %v1369
        %vm1376 = vmor %vm1374, %vm1375
        %v1377 = vsel %vm1376, %v1369, %v1373
        %v1378 = vand.u32 2147483647, %v1368
        %vm1379 = vcmp.eq.f32.partialorder %v1378, 8.507059e+37
        %v1380 = vand.u32 %v1368, 2147483648
        %v1381 = vor.u32 1.1754944e-38, %v1380
        %v1382 = vsel %vm1379, %v1381, %v1377
        %v1383 = vmul.f32 1.0, %v1382
        %vm1384 = vcmask 7168
        %1385 = vst.msk [vmem:[%s365] sm:$0xff] %vm1384, %v1383
        %p1386 = scmp.lt.s32.totalorder %s28, 1
        %s1387 = scalar_select %p1386, %s28, 1
        %s1388 = smul.addr %s1387, 8
        %s1389 = scalar_lea.vmem %s7, %s1388
        // Predicated region
        $region65: #{tpu_custom_call.1} parent=47 // pred_check
          %p1390 = pneg %p203
        $region66: #{tpu_custom_call.1} parent=47 // pred_check_branch
          %1392 = sbr.rel (%p1390) target = $region68
        $region67: #{tpu_custom_call.1} parent=47 // pred_region
          _
        $region68: #{tpu_custom_call.1} parent=47 // pred_fallthru
          _
      $region48: #{tpu_custom_call.1} parent=5 // pred_fallthru
        _
      %p1393 = scmp.le.s32.totalorder 2, %s23
      // Predicated region
      $region69: #{tpu_custom_call.1} parent=5 // pred_check
        %p1394 = pneg %p1393
      $region70: #{tpu_custom_call.1} parent=5 // pred_check_branch
        %1396 = sbr.rel (%p1394) target = $region72
      $region71: #{tpu_custom_call.1} parent=5 // pred_region
        %s1397 = ssub.s32 %s23, 2
        // Predicated region
        $region73: #{tpu_custom_call.1} parent=71 // pred_check
          %p1398 = pneg %p209
        $region74: #{tpu_custom_call.1} parent=71 // pred_check_branch
          %1400 = sbr.rel (%p1398) target = $region76
        $region75: #{tpu_custom_call.1} parent=71 // pred_region
          %p1401 = scmp.lt.s32.totalorder %s29, 1
          %s1402 = scalar_select %p1401, %s29, 1
          %s1403 = smul.addr %s1402, 8
          %s1404 = scalar_lea.vmem %s7, %s1403
        $region76: #{tpu_custom_call.1} parent=71 // pred_fallthru
          _
      $region72: #{tpu_custom_call.1} parent=5 // pred_fallthru
        _
    $region6: #{tpu_custom_call.1} parent=1 // loop_footer
      %s27 = sadd.s32 1, %s23
    $region7: #{tpu_custom_call.1} parent=1 // loop_footer_branch
      %22 = sbr.rel target = $region3
    $region8: #{tpu_custom_call.1} parent=1 // loop_exit
      _
    %1405 = vsyncpa [#allocation5], 1
    %s1406 = scalar_lea.sflag [#allocation5], 1
    %1407 = vsyncpa %s1406, 1
    %1408 = vsyncpa [#allocation8], 1
    %s1409 = scalar_lea.sflag [#allocation8], 1
    %1410 = vsyncpa %s1409, 1
    %1411 = vsyncpa [#allocation6], 1
    %s1412 = scalar_lea.sflag [#allocation6], 1
    %1413 = vsyncpa %s1412, 1
    %1414 = vsyncpa [#allocation11], 1

</llo_original>
